<compile_context>
chip_gen: v5e
topology: v5e:2x2
jax: 0.10.0
libtpu: 0.0.40
codegen_flags: <defaults>
</compile_context>

<pallas_src>
import functools
import numpy as np

import jax
import jax.numpy as jnp
from jax.experimental import pallas as pl
from jax.experimental.pallas import tpu as pltpu

EPS = 1e-5          # apex FusedRMSNorm default
NEG_INF = -1e30     # finite mask value (robust: no -inf - -inf = NaN)
VMEM_LIMIT = 64 * 1024 * 1024


# ----------------------------- kernel helpers ------------------------------

def _rms_norm(x, g, eps=EPS):
    var = jnp.mean(x * x, axis=-1, keepdims=True)
    return x * jax.lax.rsqrt(var + eps) * g


def _rotate_half(x):
    # TODO(synk): at production head_dim (64/128) use pltpu.roll + sign-folded sin.
    d = x.shape[-1]
    return jnp.concatenate([-x[..., d // 2:], x[..., : d // 2]], axis=-1)


# ----------------------- fused transformer-stack kernel ---------------------

def blocks_kernel(x_ref, cos_ref, sin_ref, wqkv_ref, wout_ref, g1_ref, g2_ref,
                  w1_ref, w2_ref, o_ref, *, B, S, D, H):
    """One transformer block per grid step; grid = (n_blocks,).

    The residual stream (B, S, D) is carried in the resident output block (same
    output block index for every l), so activations never leave VMEM between
    blocks while the per-block weights stream behind the compute."""
    l = pl.program_id(0)
    hd = D // H

    @pl.when(l == 0)
    def _():
        o_ref[...] = x_ref[...]          # load embeddings into the resident state

    x = o_ref[...].reshape(B * S, D)     # f32 residual stream, M = B*S rows
    x_skip = x

    # ---- attention branch ----
    h = _rms_norm(x, g1_ref[0])                                        # [B*S, D]
    qkv = jnp.dot(h.astype(jnp.bfloat16), wqkv_ref[0],                 # bf16 MXU
                  preferred_element_type=jnp.float32)                  # [B*S, 3D]

    def split_heads(off):
        # static lane slices per head, then stack on a new leading axis; the
        # reshape only splits the sublane dim at an 8-row tile boundary.
        hs = jnp.stack([qkv[:, off + hh * hd: off + (hh + 1) * hd]
                        for hh in range(H)], axis=0)                   # [H, B*S, hd]
        return hs.reshape(H * B, S, hd)                                # [H*B, S, hd]

    q = split_heads(0)          # Q columns were pre-scaled by 1/sqrt(hd)
    k = split_heads(D)
    v = split_heads(2 * D)

    cos = cos_ref[...][None]    # [1, S, hd] broadcasts over the H*B axis
    sin = sin_ref[...][None]
    q = q * cos + _rotate_half(q) * sin   # rotary (rotate-half), f32
    k = k * cos + _rotate_half(k) * sin

    s = jnp.einsum("gqd,gkd->gqk", q.astype(jnp.bfloat16), k.astype(jnp.bfloat16),
                   preferred_element_type=jnp.float32)                 # [H*B, S, S]
    row = jax.lax.broadcasted_iota(jnp.int32, (S, S), 0)
    col = jax.lax.broadcasted_iota(jnp.int32, (S, S), 1)
    s = jnp.where((row >= col)[None], s, NEG_INF)
    s = s - jnp.max(s, axis=-1, keepdims=True)
    p = jnp.exp(s)
    p = p * pl.reciprocal(jnp.sum(p, axis=-1, keepdims=True), approx=True)
    attn = jnp.einsum("gqk,gkd->gqd", p.astype(jnp.bfloat16), v.astype(jnp.bfloat16),
                      preferred_element_type=jnp.float32)              # [H*B, S, hd]

    # head merge folded into the Wout contraction (wout_ref is (H, hd, D) with
    # residual_scale baked in) — no lane-dim concatenate.
    attn = attn.reshape(H, B * S, hd)
    attn_out = jnp.einsum("hmd,hdo->hmo", attn.astype(jnp.bfloat16), wout_ref[0],
                          preferred_element_type=jnp.float32).sum(axis=0)  # [B*S, D]
    x = x_skip + attn_out

    # ---- MLP branch (residual_scale baked into w2_ref) ----
    x_skip = x
    h = _rms_norm(x, g2_ref[0])
    h = jnp.dot(h.astype(jnp.bfloat16), w1_ref[0], preferred_element_type=jnp.float32)
    h = jax.nn.gelu(h, approximate=True)   # flash_attn FusedMLP: tanh-approx GELU
    h = jnp.dot(h.astype(jnp.bfloat16), w2_ref[0], preferred_element_type=jnp.float32)
    x = x_skip + h

    o_ref[...] = x.reshape(B, S, D)


# ------------------------------ readout kernel ------------------------------

def readout_kernel(x_ref, g_ref, w_ref, b_ref, first_ref, o_ref):
    B, S, D = x_ref.shape
    TV = o_ref.shape[-1]
    x = x_ref[...].reshape(B * S, D)
    h = _rms_norm(x, g_ref[...])              # output_norm (recomputed per vocab tile)
    logits = jnp.dot(h.astype(jnp.bfloat16), w_ref[...],
                     preferred_element_type=jnp.float32) + b_ref[...]
    logits = logits.reshape(B, S, TV)
    # In-kernel next-token shift: row 0 <- first_token_logits, row s <- logits[s-1].
    first_rows = jnp.broadcast_to(first_ref[...][None], (B, 1, TV))
    o_ref[...] = jnp.concatenate([first_rows, logits[:, :S - 1, :]], axis=1)


# ------------------------------ wrappers -------------------------------------

def run_blocks(x, cos, sin, stacked, n_heads):
    B, S, D = x.shape
    L = stacked["wqkv_t"].shape[0]
    hd = D // n_heads
    kernel = functools.partial(blocks_kernel, B=B, S=S, D=D, H=n_heads)
    amap = lambda l: (0, 0, 0)     # resident activation / output block
    wmap = lambda l: (l, 0, 0)     # per-transformer-block weights
    cmap = lambda l: (0, 0)        # rotary tables: resident, fetched once
    return pl.pallas_call(
        kernel,
        out_shape=jax.ShapeDtypeStruct((B, S, D), jnp.float32),
        grid=(L,),
        in_specs=[
            pl.BlockSpec((B, S, D), amap),                   # x (embeddings)
            pl.BlockSpec((S, hd), cmap),                     # cos
            pl.BlockSpec((S, hd), cmap),                     # sin
            pl.BlockSpec((1, D, 3 * D), wmap),               # wqkv_t  (bf16, Q pre-scaled)
            pl.BlockSpec((1, n_heads, hd, D),
                         lambda l: (l, 0, 0, 0)),            # wout3   (bf16, *res_scale)
            pl.BlockSpec((1, 1, D), wmap),                   # g1
            pl.BlockSpec((1, 1, D), wmap),                   # g2
            pl.BlockSpec((1, D, 4 * D), wmap),               # w1_t    (bf16)
            pl.BlockSpec((1, 4 * D, D), wmap),               # w2_t    (bf16, *res_scale)
        ],
        out_specs=pl.BlockSpec((B, S, D), amap),
        compiler_params=pltpu.CompilerParams(
            dimension_semantics=("arbitrary",),              # blocks are sequential
            vmem_limit_bytes=VMEM_LIMIT),
    )(x, cos, sin, stacked["wqkv_t"], stacked["wout3"],
      stacked["g1"], stacked["g2"], stacked["w1_t"], stacked["w2_t"])


def run_readout(x, g_out, w_readout_t, b_readout, first_token_logits):
    B, S, D = x.shape
    V = w_readout_t.shape[1]
    if V % 512 == 0:
        TV = 512
    elif V % 256 == 0:
        TV = 256
    elif V % 128 == 0:
        TV = 128
    else:
        TV = V   # TODO(synk): pad vocab to a multiple of 128 at production sizes
    return pl.pallas_call(
        readout_kernel,
        out_shape=jax.ShapeDtypeStruct((B, S, V), jnp.float32),
        grid=(V // TV,),
        in_specs=[
            pl.BlockSpec((B, S, D), lambda j: (0, 0, 0)),    # x (resident)
            pl.BlockSpec((1, D), lambda j: (0, 0)),          # output_norm weight
            pl.BlockSpec((D, TV), lambda j: (0, j)),         # readout weight (bf16)
            pl.BlockSpec((1, TV), lambda j: (0, j)),         # readout bias
            pl.BlockSpec((1, TV), lambda j: (0, j)),         # first_token_logits
        ],
        out_specs=pl.BlockSpec((B, S, TV), lambda j: (0, 0, j)),
        compiler_params=pltpu.CompilerParams(
            dimension_semantics=("parallel",),
            vmem_limit_bytes=VMEM_LIMIT),
    )(x, g_out, w_readout_t, b_readout, first_token_logits)


def rotary_cos_sin(seq_len, head_dim, base=10000.0):
    inv_freq = 1.0 / (base ** (np.arange(0, head_dim, 2, dtype=np.float32) / head_dim))
    t = np.arange(seq_len, dtype=np.float32)
    freqs = np.einsum("i,j->ij", t, inv_freq)
    emb = np.concatenate([freqs, freqs], axis=-1)        # [S, head_dim]
    return jnp.asarray(np.cos(emb)), jnp.asarray(np.sin(emb))


# ------------------------------ parameters -----------------------------------

def init_params(key, dim, n_blocks, n_heads, vocab_size):
    # tie_embeddings = False path: separate input embedding table (PyTorch layout).
    def nrm(k, shape, scale=0.02):
        return scale * jax.random.normal(k, shape, dtype=jnp.float32)

    keys = iter(jax.random.split(key, 3 + 4 * n_blocks))
    params = {
        "emb": nrm(next(keys), (vocab_size, dim), 1.0),
        "g_out": jnp.ones((dim,), jnp.float32),
        "w_readout": nrm(next(keys), (vocab_size, dim)),
        "b_readout": nrm(next(keys), (vocab_size,)),
        "first_token_logits": jnp.zeros((vocab_size,), jnp.float32),
        "blocks": [],
    }
    for _ in range(n_blocks):
        params["blocks"].append({
            "g1": jnp.ones((dim,), jnp.float32),
            "g2": jnp.ones((dim,), jnp.float32),
            "wqkv": nrm(next(keys), (3 * dim, dim)),
            "wout": nrm(next(keys), (dim, dim)),
            "w1": nrm(next(keys), (4 * dim, dim)),
            "w2": nrm(next(keys), (dim, 4 * dim)),
        })
    return params


def prepare_params(params, n_heads):
    """One-time: transpose to (in, out), bake scalars into weights, cast to bf16, stack."""
    blocks = params["blocks"]
    L = len(blocks)
    D = int(params["g_out"].shape[0])
    hd = D // n_heads
    residual_scale = float(1.0 / np.sqrt(L))
    q_scale = float(1.0 / np.sqrt(hd))

    wqkv_t, wout3, w1_t, w2_t, g1, g2 = [], [], [], [], [], []
    for b in blocks:
        wqkv = b["wqkv"].at[:D, :].multiply(q_scale)      # bake 1/sqrt(hd) into Q rows
        wqkv_t.append(wqkv.T.astype(jnp.bfloat16))                         # (D, 3D)
        wo = (b["wout"].T * residual_scale).reshape(n_heads, hd, D)        # (H, hd, D)
        wout3.append(wo.astype(jnp.bfloat16))
        w1_t.append(b["w1"].T.astype(jnp.bfloat16))                        # (D, 4D)
        w2_t.append((b["w2"].T * residual_scale).astype(jnp.bfloat16))     # (4D, D)
        g1.append(b["g1"][None, :])
        g2.append(b["g2"][None, :])

    stacked = {
        "wqkv_t": jnp.stack(wqkv_t),
        "wout3":  jnp.stack(wout3),
        "w1_t":   jnp.stack(w1_t),
        "w2_t":   jnp.stack(w2_t),
        "g1":     jnp.stack(g1),
        "g2":     jnp.stack(g2),
    }
    return {
        "emb": params["emb"],
        "g_out": params["g_out"][None, :],
        "w_readout_t": params["w_readout"].T.astype(jnp.bfloat16),  # bf16 weights,
        "b_readout": params["b_readout"][None, :],                   # f32 accumulation
        "first_token_logits": params["first_token_logits"][None, :],
        "stacked": stacked,
    }


# ------------------------------ forward --------------------------------------

@functools.partial(jax.jit, static_argnames=("n_heads",))
def autoregressive_model(tokens, prepared, n_heads):
    B, S = tokens.shape
    x = prepared["emb"][tokens]                        # embedding gather (glue)
    D = x.shape[-1]
    cos, sin = rotary_cos_sin(S, D // n_heads)
    x = run_blocks(x, cos, sin, prepared["stacked"], n_heads)
    # readout kernel applies output_norm, readout matmul AND the next-token shift
    # (row 0 = first_token_logits) — no post-kernel concatenate.
    return run_readout(x, prepared["g_out"], prepared["w_readout_t"],
                       prepared["b_readout"], prepared["first_token_logits"])


# -------------------------------- main ----------------------------------------

if __name__ == "__main__":
    dim, n_blocks, n_heads, vocab_size = 64, 2, 4, 128
    batch, seq = 2, 8

    key = jax.random.PRNGKey(0)
    k_par, k_tok = jax.random.split(key)
    raw_params = init_params(k_par, dim, n_blocks, n_heads, vocab_size)
    prepared = prepare_params(raw_params, n_heads)
    tokens = jax.random.randint(k_tok, (batch, seq), 0, vocab_size, dtype=jnp.int32)

    logits = autoregressive_model(tokens, prepared, n_heads=n_heads)
    logits = jax.block_until_ready(logits)

    assert logits.shape == (batch, seq, vocab_size), logits.shape
    assert bool(jnp.all(jnp.isfinite(logits)))
    # first position must be exactly first_token_logits (zeros here)
    assert bool(jnp.all(logits[:, 0, :] == 0.0))

    print("KERNEL_OK")
</pallas_src>

<mosaic_0001>
module attributes {stable_mosaic.version = 11 : i64} {
  func.func @readout_kernel(%arg0: i32, %arg1: memref<2x8x64xf32, #tpu.memory_space<vmem>>, %arg2: memref<1x64xf32, #tpu.memory_space<vmem>>, %arg3: memref<64x128xbf16, #tpu.memory_space<vmem>>, %arg4: memref<1x128xf32, #tpu.memory_space<vmem>>, %arg5: memref<1x128xf32, #tpu.memory_space<vmem>>, %arg6: memref<2x8x128xf32, #tpu.memory_space<vmem>>) attributes {dimension_semantics = [#tpu.dimension_semantics<parallel>], iteration_bounds = array<i64: 1>, scalar_prefetch = 0 : i64, scratch_operands = 0 : i64, tpu.core_type = #tpu.core_type<tc>, window_params = [{pipeline_mode = #tpu.pipeline_mode<synchronous>, transform_indices = @transform_0, window_bounds = array<i64: 2, 8, 64>}, {pipeline_mode = #tpu.pipeline_mode<synchronous>, transform_indices = @transform_1, window_bounds = array<i64: 1, 64>}, {transform_indices = @transform_2, window_bounds = array<i64: 64, 128>}, {transform_indices = @transform_3, window_bounds = array<i64: 1, 128>}, {transform_indices = @transform_4, window_bounds = array<i64: 1, 128>}, {transform_indices = @transform_5, window_bounds = array<i64: 2, 8, 128>}]} {
    %c0 = arith.constant 0 : index
    %c0_0 = arith.constant 0 : index
    %c0_1 = arith.constant 0 : index
    %0 = vector.load %arg1[%c0, %c0_0, %c0_1] : memref<2x8x64xf32, #tpu.memory_space<vmem>>, vector<2x8x64xf32>
    %1 = vector.shape_cast %0 : vector<2x8x64xf32> to vector<16x64xf32>
    %c0_2 = arith.constant 0 : index
    %c0_3 = arith.constant 0 : index
    %2 = vector.load %arg2[%c0_2, %c0_3] : memref<1x64xf32, #tpu.memory_space<vmem>>, vector<1x64xf32>
    %3 = arith.mulf %1, %1 : vector<16x64xf32>
    %cst = arith.constant dense<0.000000e+00> : vector<16xf32>
    %4 = vector.multi_reduction <add>, %3, %cst [1] : vector<16x64xf32> to vector<16xf32>
    %5 = vector.shape_cast %4 : vector<16xf32> to vector<16x1xf32>
    %cst_4 = arith.constant 6.400000e+01 : f32
    %6 = vector.broadcast %cst_4 : f32 to vector<16x1xf32>
    %7 = arith.divf %5, %6 : vector<16x1xf32>
    %cst_5 = arith.constant 9.99999974E-6 : f32
    %8 = vector.broadcast %cst_5 : f32 to vector<16x1xf32>
    %9 = arith.addf %7, %8 : vector<16x1xf32>
    %10 = math.rsqrt %9 : vector<16x1xf32>
    %11 = vector.broadcast %10 : vector<16x1xf32> to vector<16x64xf32>
    %12 = arith.mulf %1, %11 : vector<16x64xf32>
    %13 = vector.broadcast %2 : vector<1x64xf32> to vector<16x64xf32>
    %14 = arith.mulf %12, %13 : vector<16x64xf32>
    %15 = arith.truncf %14 : vector<16x64xf32> to vector<16x64xbf16>
    %c0_6 = arith.constant 0 : index
    %c0_7 = arith.constant 0 : index
    %16 = vector.load %arg3[%c0_6, %c0_7] : memref<64x128xbf16, #tpu.memory_space<vmem>>, vector<64x128xbf16>
    %cst_8 = arith.constant dense<0.000000e+00> : vector<16x128xf32>
    %17 = tpu.matmul %15, %16, %cst_8 {dimension_numbers = #tpu.dot_dimension_numbers<[1], [0], [0], [1], [0, 0, 1, 1], [], []>} : vector<16x64xbf16>, vector<64x128xbf16>, vector<16x128xf32> -> vector<16x128xf32>
    %c0_9 = arith.constant 0 : index
    %c0_10 = arith.constant 0 : index
    %18 = vector.load %arg4[%c0_9, %c0_10] : memref<1x128xf32, #tpu.memory_space<vmem>>, vector<1x128xf32>
    %19 = vector.broadcast %18 : vector<1x128xf32> to vector<16x128xf32>
    %20 = arith.addf %17, %19 : vector<16x128xf32>
    %21 = vector.shape_cast %20 : vector<16x128xf32> to vector<2x8x128xf32>
    %c0_11 = arith.constant 0 : index
    %c0_12 = arith.constant 0 : index
    %22 = vector.load %arg5[%c0_11, %c0_12] : memref<1x128xf32, #tpu.memory_space<vmem>>, vector<1x128xf32>
    %23 = vector.shape_cast %22 : vector<1x128xf32> to vector<1x1x128xf32>
    %24 = vector.shape_cast %23 : vector<1x1x128xf32> to vector<1x1x128xf32>
    %25 = vector.broadcast %24 : vector<1x1x128xf32> to vector<2x1x128xf32>
    %26 = vector.extract_strided_slice %21 {offsets = [0, 0, 0], sizes = [2, 7, 128], strides = [1, 1, 1]} : vector<2x8x128xf32> to vector<2x7x128xf32>
    %27 = tpu.concatenate %25, %26 in 1 : vector<2x1x128xf32>, vector<2x7x128xf32> -> vector<2x8x128xf32>
    %c0_13 = arith.constant 0 : index
    %c0_14 = arith.constant 0 : index
    %c0_15 = arith.constant 0 : index
    %28 = vector.load %arg6[%c0_13, %c0_14, %c0_15] : memref<2x8x128xf32, #tpu.memory_space<vmem>>, vector<2x8x128xf32>
    tpu.vector_store %arg6[%c0_13, %c0_14, %c0_15], %27 {strides = array<i32>} : memref<2x8x128xf32, #tpu.memory_space<vmem>>, vector<2x8x128xf32>,
    return
  }
  func.func @transform_0(%arg0: i32) -> (i32, i32, i32) {
    %c0_i32 = arith.constant 0 : i32
    %c0_i32_0 = arith.constant 0 : i32
    %c0_i32_1 = arith.constant 0 : i32
    %c0_i32_2 = arith.constant 0 : i32
    return %c0_i32, %c0_i32_0, %c0_i32_1 : i32, i32, i32
  }
  func.func @transform_1(%arg0: i32) -> (i32, i32) {
    %c0_i32 = arith.constant 0 : i32
    %c0_i32_0 = arith.constant 0 : i32
    %c0_i32_1 = arith.constant 0 : i32
    return %c0_i32, %c0_i32_0 : i32, i32
  }
  func.func @transform_2(%arg0: i32) -> (i32, i32) {
    %c0_i32 = arith.constant 0 : i32
    %c0_i32_0 = arith.constant 0 : i32
    return %c0_i32, %arg0 : i32, i32
  }
  func.func @transform_3(%arg0: i32) -> (i32, i32) {
    %c0_i32 = arith.constant 0 : i32
    %c0_i32_0 = arith.constant 0 : i32
    return %c0_i32, %arg0 : i32, i32
  }
  func.func @transform_4(%arg0: i32) -> (i32, i32) {
    %c0_i32 = arith.constant 0 : i32
    %c0_i32_0 = arith.constant 0 : i32
    return %c0_i32, %arg0 : i32, i32
  }
  func.func @transform_5(%arg0: i32) -> (i32, i32, i32) {
    %c0_i32 = arith.constant 0 : i32
    %c0_i32_0 = arith.constant 0 : i32
    %c0_i32_1 = arith.constant 0 : i32
    return %c0_i32, %c0_i32_0, %arg0 : i32, i32, i32
  }
}

module attributes {stable_mosaic.version = 11 : i64} {
  func.func @blocks_kernel(%arg0: i32, %arg1: memref<2x8x64xf32, #tpu.memory_space<vmem>>, %arg2: memref<8x16xf32, #tpu.memory_space<vmem>>, %arg3: memref<8x16xf32, #tpu.memory_space<vmem>>, %arg4: memref<1x64x192xbf16, #tpu.memory_space<vmem>>, %arg5: memref<1x4x16x64xbf16, #tpu.memory_space<vmem>>, %arg6: memref<1x1x64xf32, #tpu.memory_space<vmem>>, %arg7: memref<1x1x64xf32, #tpu.memory_space<vmem>>, %arg8: memref<1x64x256xbf16, #tpu.memory_space<vmem>>, %arg9: memref<1x256x64xbf16, #tpu.memory_space<vmem>>, %arg10: memref<2x8x64xf32, #tpu.memory_space<vmem>>) attributes {dimension_semantics = [#tpu.dimension_semantics<arbitrary>], iteration_bounds = array<i64: 2>, scalar_prefetch = 0 : i64, scratch_operands = 0 : i64, tpu.core_type = #tpu.core_type<tc>, window_params = [{pipeline_mode = #tpu.pipeline_mode<synchronous>, transform_indices = @transform_0, window_bounds = array<i64: 2, 8, 64>}, {pipeline_mode = #tpu.pipeline_mode<synchronous>, transform_indices = @transform_1, window_bounds = array<i64: 8, 16>}, {pipeline_mode = #tpu.pipeline_mode<synchronous>, transform_indices = @transform_2, window_bounds = array<i64: 8, 16>}, {transform_indices = @transform_3, window_bounds = array<i64: 1, 64, 192>}, {transform_indices = @transform_4, window_bounds = array<i64: 1, 4, 16, 64>}, {transform_indices = @transform_5, window_bounds = array<i64: 1, 1, 64>}, {transform_indices = @transform_6, window_bounds = array<i64: 1, 1, 64>}, {transform_indices = @transform_7, window_bounds = array<i64: 1, 64, 256>}, {transform_indices = @transform_8, window_bounds = array<i64: 1, 256, 64>}, {pipeline_mode = #tpu.pipeline_mode<synchronous>, transform_indices = @transform_9, window_bounds = array<i64: 2, 8, 64>}]} {
    %c0_i32 = arith.constant 0 : i32
    %0 = arith.cmpi eq, %arg0, %c0_i32 : i32
    %1 = arith.extui %0 : i1 to i32
    %c0_i32_0 = arith.constant 0 : i32
    %2 = arith.cmpi ne, %1, %c0_i32_0 : i32
    scf.if %2 {
      %c0_50 = arith.constant 0 : index
      %c0_51 = arith.constant 0 : index
      %c0_52 = arith.constant 0 : index
      %146 = vector.load %arg1[%c0_50, %c0_51, %c0_52] : memref<2x8x64xf32, #tpu.memory_space<vmem>>, vector<2x8x64xf32>
      %c0_53 = arith.constant 0 : index
      %c0_54 = arith.constant 0 : index
      %c0_55 = arith.constant 0 : index
      %147 = vector.load %arg10[%c0_53, %c0_54, %c0_55] : memref<2x8x64xf32, #tpu.memory_space<vmem>>, vector<2x8x64xf32>
      tpu.vector_store %arg10[%c0_53, %c0_54, %c0_55], %146 {strides = array<i32>} : memref<2x8x64xf32, #tpu.memory_space<vmem>>, vector<2x8x64xf32>,
    } else {
    }
    %c0 = arith.constant 0 : index
    %c0_1 = arith.constant 0 : index
    %c0_2 = arith.constant 0 : index
    %3 = vector.load %arg10[%c0, %c0_1, %c0_2] : memref<2x8x64xf32, #tpu.memory_space<vmem>>, vector<2x8x64xf32>
    %4 = vector.shape_cast %3 : vector<2x8x64xf32> to vector<16x64xf32>
    %c0_3 = arith.constant 0 : index
    %c0_4 = arith.constant 0 : index
    %c0_5 = arith.constant 0 : index
    %5 = vector.load %arg6[%c0_3, %c0_4, %c0_5] : memref<1x1x64xf32, #tpu.memory_space<vmem>>, vector<1x1x64xf32>
    %6 = vector.shape_cast %5 : vector<1x1x64xf32> to vector<1x64xf32>
    %7 = arith.mulf %4, %4 : vector<16x64xf32>
    %cst = arith.constant dense<0.000000e+00> : vector<16xf32>
    %8 = vector.multi_reduction <add>, %7, %cst [1] : vector<16x64xf32> to vector<16xf32>
    %9 = vector.shape_cast %8 : vector<16xf32> to vector<16x1xf32>
    %cst_6 = arith.constant 6.400000e+01 : f32
    %10 = vector.broadcast %cst_6 : f32 to vector<16x1xf32>
    %11 = arith.divf %9, %10 : vector<16x1xf32>
    %cst_7 = arith.constant 9.99999974E-6 : f32
    %12 = vector.broadcast %cst_7 : f32 to vector<16x1xf32>
    %13 = arith.addf %11, %12 : vector<16x1xf32>
    %14 = math.rsqrt %13 : vector<16x1xf32>
    %15 = vector.broadcast %14 : vector<16x1xf32> to vector<16x64xf32>
    %16 = arith.mulf %4, %15 : vector<16x64xf32>
    %17 = vector.broadcast %6 : vector<1x64xf32> to vector<16x64xf32>
    %18 = arith.mulf %16, %17 : vector<16x64xf32>
    %19 = arith.truncf %18 : vector<16x64xf32> to vector<16x64xbf16>
    %c0_8 = arith.constant 0 : index
    %c0_9 = arith.constant 0 : index
    %c0_10 = arith.constant 0 : index
    %20 = vector.load %arg4[%c0_8, %c0_9, %c0_10] : memref<1x64x192xbf16, #tpu.memory_space<vmem>>, vector<1x64x192xbf16>
    %21 = vector.shape_cast %20 : vector<1x64x192xbf16> to vector<64x192xbf16>
    %cst_11 = arith.constant dense<0.000000e+00> : vector<16x192xf32>
    %22 = tpu.matmul %19, %21, %cst_11 {dimension_numbers = #tpu.dot_dimension_numbers<[1], [0], [0], [1], [0, 0, 1, 1], [], []>} : vector<16x64xbf16>, vector<64x192xbf16>, vector<16x192xf32> -> vector<16x192xf32>
    %23 = vector.extract_strided_slice %22 {offsets = [0, 0], sizes = [16, 16], strides = [1, 1]} : vector<16x192xf32> to vector<16x16xf32>
    %24 = vector.extract_strided_slice %22 {offsets = [0, 16], sizes = [16, 16], strides = [1, 1]} : vector<16x192xf32> to vector<16x16xf32>
    %25 = vector.extract_strided_slice %22 {offsets = [0, 32], sizes = [16, 16], strides = [1, 1]} : vector<16x192xf32> to vector<16x16xf32>
    %26 = vector.extract_strided_slice %22 {offsets = [0, 48], sizes = [16, 16], strides = [1, 1]} : vector<16x192xf32> to vector<16x16xf32>
    %27 = vector.shape_cast %23 : vector<16x16xf32> to vector<1x16x16xf32>
    %28 = vector.shape_cast %24 : vector<16x16xf32> to vector<1x16x16xf32>
    %29 = vector.shape_cast %25 : vector<16x16xf32> to vector<1x16x16xf32>
    %30 = vector.shape_cast %26 : vector<16x16xf32> to vector<1x16x16xf32>
    %31 = tpu.concatenate %27, %28, %29, %30 in 0 : vector<1x16x16xf32>, vector<1x16x16xf32>, vector<1x16x16xf32>, vector<1x16x16xf32> -> vector<4x16x16xf32>
    %32 = vector.shape_cast %31 : vector<4x16x16xf32> to vector<8x8x16xf32>
    %33 = vector.extract_strided_slice %22 {offsets = [0, 64], sizes = [16, 16], strides = [1, 1]} : vector<16x192xf32> to vector<16x16xf32>
    %34 = vector.extract_strided_slice %22 {offsets = [0, 80], sizes = [16, 16], strides = [1, 1]} : vector<16x192xf32> to vector<16x16xf32>
    %35 = vector.extract_strided_slice %22 {offsets = [0, 96], sizes = [16, 16], strides = [1, 1]} : vector<16x192xf32> to vector<16x16xf32>
    %36 = vector.extract_strided_slice %22 {offsets = [0, 112], sizes = [16, 16], strides = [1, 1]} : vector<16x192xf32> to vector<16x16xf32>
    %37 = vector.shape_cast %33 : vector<16x16xf32> to vector<1x16x16xf32>
    %38 = vector.shape_cast %34 : vector<16x16xf32> to vector<1x16x16xf32>
    %39 = vector.shape_cast %35 : vector<16x16xf32> to vector<1x16x16xf32>
    %40 = vector.shape_cast %36 : vector<16x16xf32> to vector<1x16x16xf32>
    %41 = tpu.concatenate %37, %38, %39, %40 in 0 : vector<1x16x16xf32>, vector<1x16x16xf32>, vector<1x16x16xf32>, vector<1x16x16xf32> -> vector<4x16x16xf32>
    %42 = vector.shape_cast %41 : vector<4x16x16xf32> to vector<8x8x16xf32>
    %43 = vector.extract_strided_slice %22 {offsets = [0, 128], sizes = [16, 16], strides = [1, 1]} : vector<16x192xf32> to vector<16x16xf32>
    %44 = vector.extract_strided_slice %22 {offsets = [0, 144], sizes = [16, 16], strides = [1, 1]} : vector<16x192xf32> to vector<16x16xf32>
    %45 = vector.extract_strided_slice %22 {offsets = [0, 160], sizes = [16, 16], strides = [1, 1]} : vector<16x192xf32> to vector<16x16xf32>
    %46 = vector.extract_strided_slice %22 {offsets = [0, 176], sizes = [16, 16], strides = [1, 1]} : vector<16x192xf32> to vector<16x16xf32>
    %47 = vector.shape_cast %43 : vector<16x16xf32> to vector<1x16x16xf32>
    %48 = vector.shape_cast %44 : vector<16x16xf32> to vector<1x16x16xf32>
    %49 = vector.shape_cast %45 : vector<16x16xf32> to vector<1x16x16xf32>
    %50 = vector.shape_cast %46 : vector<16x16xf32> to vector<1x16x16xf32>
    %51 = tpu.concatenate %47, %48, %49, %50 in 0 : vector<1x16x16xf32>, vector<1x16x16xf32>, vector<1x16x16xf32>, vector<1x16x16xf32> -> vector<4x16x16xf32>
    %52 = vector.shape_cast %51 : vector<4x16x16xf32> to vector<8x8x16xf32>
    %c0_12 = arith.constant 0 : index
    %c0_13 = arith.constant 0 : index
    %53 = vector.load %arg2[%c0_12, %c0_13] : memref<8x16xf32, #tpu.memory_space<vmem>>, vector<8x16xf32>
    %54 = vector.shape_cast %53 : vector<8x16xf32> to vector<1x8x16xf32>
    %c0_14 = arith.constant 0 : index
    %c0_15 = arith.constant 0 : index
    %55 = vector.load %arg3[%c0_14, %c0_15] : memref<8x16xf32, #tpu.memory_space<vmem>>, vector<8x16xf32>
    %56 = vector.shape_cast %55 : vector<8x16xf32> to vector<1x8x16xf32>
    %57 = vector.broadcast %54 : vector<1x8x16xf32> to vector<8x8x16xf32>
    %58 = arith.mulf %32, %57 : vector<8x8x16xf32>
    %59 = vector.extract_strided_slice %32 {offsets = [0, 0, 8], sizes = [8, 8, 8], strides = [1, 1, 1]} : vector<8x8x16xf32> to vector<8x8x8xf32>
    %cst_16 = arith.constant 0.000000e+00 : f32
    %60 = vector.broadcast %cst_16 : f32 to vector<8x8x8xf32>
    %61 = arith.subf %60, %59 : vector<8x8x8xf32>
    %62 = vector.extract_strided_slice %32 {offsets = [0, 0, 0], sizes = [8, 8, 8], strides = [1, 1, 1]} : vector<8x8x16xf32> to vector<8x8x8xf32>
    %63 = tpu.concatenate %61, %62 in 2 : vector<8x8x8xf32>, vector<8x8x8xf32> -> vector<8x8x16xf32>
    %64 = vector.broadcast %56 : vector<1x8x16xf32> to vector<8x8x16xf32>
    %65 = arith.mulf %63, %64 : vector<8x8x16xf32>
    %66 = arith.addf %58, %65 : vector<8x8x16xf32>
    %67 = vector.broadcast %54 : vector<1x8x16xf32> to vector<8x8x16xf32>
    %68 = arith.mulf %42, %67 : vector<8x8x16xf32>
    %69 = vector.extract_strided_slice %42 {offsets = [0, 0, 8], sizes = [8, 8, 8], strides = [1, 1, 1]} : vector<8x8x16xf32> to vector<8x8x8xf32>
    %cst_17 = arith.constant 0.000000e+00 : f32
    %70 = vector.broadcast %cst_17 : f32 to vector<8x8x8xf32>
    %71 = arith.subf %70, %69 : vector<8x8x8xf32>
    %72 = vector.extract_strided_slice %42 {offsets = [0, 0, 0], sizes = [8, 8, 8], strides = [1, 1, 1]} : vector<8x8x16xf32> to vector<8x8x8xf32>
    %73 = tpu.concatenate %71, %72 in 2 : vector<8x8x8xf32>, vector<8x8x8xf32> -> vector<8x8x16xf32>
    %74 = vector.broadcast %56 : vector<1x8x16xf32> to vector<8x8x16xf32>
    %75 = arith.mulf %73, %74 : vector<8x8x16xf32>
    %76 = arith.addf %68, %75 : vector<8x8x16xf32>
    %77 = arith.truncf %66 : vector<8x8x16xf32> to vector<8x8x16xbf16>
    %78 = arith.truncf %76 : vector<8x8x16xf32> to vector<8x8x16xbf16>
    "tpu.trace_start"() <{level = 10 : i32, message = "gqd,gkd->gqk"}> : () -> ()
    %cst_18 = arith.constant dense<0.000000e+00> : vector<8x8x8xf32>
    %79 = tpu.matmul %77, %78, %cst_18 {dimension_numbers = #tpu.dot_dimension_numbers<[2], [2], [1], [1], [0, 0, 0, 1, 1, 1], [0], [0]>} : vector<8x8x16xbf16>, vector<8x8x16xbf16>, vector<8x8x8xf32> -> vector<8x8x8xf32>
    "tpu.trace_stop"() : () -> ()
    %80 = tpu.iota {dimensions = array<i32: 0>} : vector<8x8xi32>
    %81 = tpu.iota {dimensions = array<i32: 1>} : vector<8x8xi32>
    %82 = arith.cmpi sge, %80, %81 : vector<8x8xi32>
    %83 = vector.shape_cast %82 : vector<8x8xi1> to vector<1x8x8xi1>
    %cst_19 = arith.constant -1.000000e+30 : f32
    %84 = vector.shape_cast %83 : vector<1x8x8xi1> to vector<1x8x8xi1>
    %85 = vector.broadcast %84 : vector<1x8x8xi1> to vector<8x8x8xi1>
    %86 = vector.broadcast %cst_19 : f32 to vector<8x8x8xf32>
    %87 = arith.select %85, %79, %86 : vector<8x8x8xi1>, vector<8x8x8xf32>
    %cst_20 = arith.constant dense<0xFF800000> : vector<8x8xf32>
    %88 = vector.multi_reduction <maximumf>, %87, %cst_20 [2] : vector<8x8x8xf32> to vector<8x8xf32>
    %89 = vector.shape_cast %88 : vector<8x8xf32> to vector<8x8x1xf32>
    %90 = vector.broadcast %89 : vector<8x8x1xf32> to vector<8x8x8xf32>
    %91 = arith.subf %87, %90 : vector<8x8x8xf32>
    %92 = math.exp %91 : vector<8x8x8xf32>
    %cst_21 = arith.constant dense<0.000000e+00> : vector<8x8xf32>
    %93 = vector.multi_reduction <add>, %92, %cst_21 [2] : vector<8x8x8xf32> to vector<8x8xf32>
    %94 = vector.shape_cast %93 : vector<8x8xf32> to vector<8x8x1xf32>
    %95 = tpu.reciprocal %94 {approx = true} : vector<8x8x1xf32> -> vector<8x8x1xf32>
    %96 = vector.broadcast %95 : vector<8x8x1xf32> to vector<8x8x8xf32>
    %97 = arith.mulf %92, %96 : vector<8x8x8xf32>
    %98 = arith.truncf %97 : vector<8x8x8xf32> to vector<8x8x8xbf16>
    %99 = arith.truncf %52 : vector<8x8x16xf32> to vector<8x8x16xbf16>
    "tpu.trace_start"() <{level = 10 : i32, message = "gqk,gkd->gqd"}> : () -> ()
    %cst_22 = arith.constant dense<0.000000e+00> : vector<8x8x16xf32>
    %100 = tpu.matmul %98, %99, %cst_22 {dimension_numbers = #tpu.dot_dimension_numbers<[2], [1], [1], [2], [0, 0, 0, 1, 1, 2], [0], [0]>} : vector<8x8x8xbf16>, vector<8x8x16xbf16>, vector<8x8x16xf32> -> vector<8x8x16xf32>
    "tpu.trace_stop"() : () -> ()
    %101 = vector.shape_cast %100 : vector<8x8x16xf32> to vector<4x16x16xf32>
    %102 = arith.truncf %101 : vector<4x16x16xf32> to vector<4x16x16xbf16>
    %c0_23 = arith.constant 0 : index
    %c0_24 = arith.constant 0 : index
    %c0_25 = arith.constant 0 : index
    %c0_26 = arith.constant 0 : index
    %103 = vector.load %arg5[%c0_23, %c0_24, %c0_25, %c0_26] : memref<1x4x16x64xbf16, #tpu.memory_space<vmem>>, vector<1x4x16x64xbf16>
    %104 = vector.shape_cast %103 : vector<1x4x16x64xbf16> to vector<4x16x64xbf16>
    "tpu.trace_start"() <{level = 10 : i32, message = "hmd,hdo->hmo"}> : () -> ()
    %cst_27 = arith.constant dense<0.000000e+00> : vector<4x16x64xf32>
    %105 = tpu.matmul %102, %104, %cst_27 {dimension_numbers = #tpu.dot_dimension_numbers<[2], [1], [1], [2], [0, 0, 0, 1, 1, 2], [0], [0]>} : vector<4x16x16xbf16>, vector<4x16x64xbf16>, vector<4x16x64xf32> -> vector<4x16x64xf32>
    "tpu.trace_stop"() : () -> ()
    %cst_28 = arith.constant dense<0.000000e+00> : vector<16x64xf32>
    %106 = vector.multi_reduction <add>, %105, %cst_28 [0] : vector<4x16x64xf32> to vector<16x64xf32>
    %107 = arith.addf %4, %106 : vector<16x64xf32>
    %c0_29 = arith.constant 0 : index
    %c0_30 = arith.constant 0 : index
    %c0_31 = arith.constant 0 : index
    %108 = vector.load %arg7[%c0_29, %c0_30, %c0_31] : memref<1x1x64xf32, #tpu.memory_space<vmem>>, vector<1x1x64xf32>
    %109 = vector.shape_cast %108 : vector<1x1x64xf32> to vector<1x64xf32>
    %110 = arith.mulf %107, %107 : vector<16x64xf32>
    %cst_32 = arith.constant dense<0.000000e+00> : vector<16xf32>
    %111 = vector.multi_reduction <add>, %110, %cst_32 [1] : vector<16x64xf32> to vector<16xf32>
    %112 = vector.shape_cast %111 : vector<16xf32> to vector<16x1xf32>
    %cst_33 = arith.constant 6.400000e+01 : f32
    %113 = vector.broadcast %cst_33 : f32 to vector<16x1xf32>
    %114 = arith.divf %112, %113 : vector<16x1xf32>
    %cst_34 = arith.constant 9.99999974E-6 : f32
    %115 = vector.broadcast %cst_34 : f32 to vector<16x1xf32>
    %116 = arith.addf %114, %115 : vector<16x1xf32>
    %117 = math.rsqrt %116 : vector<16x1xf32>
    %118 = vector.broadcast %117 : vector<16x1xf32> to vector<16x64xf32>
    %119 = arith.mulf %107, %118 : vector<16x64xf32>
    %120 = vector.broadcast %109 : vector<1x64xf32> to vector<16x64xf32>
    %121 = arith.mulf %119, %120 : vector<16x64xf32>
    %122 = arith.truncf %121 : vector<16x64xf32> to vector<16x64xbf16>
    %c0_35 = arith.constant 0 : index
    %c0_36 = arith.constant 0 : index
    %c0_37 = arith.constant 0 : index
    %123 = vector.load %arg8[%c0_35, %c0_36, %c0_37] : memref<1x64x256xbf16, #tpu.memory_space<vmem>>, vector<1x64x256xbf16>
    %124 = vector.shape_cast %123 : vector<1x64x256xbf16> to vector<64x256xbf16>
    %cst_38 = arith.constant dense<0.000000e+00> : vector<16x256xf32>
    %125 = tpu.matmul %122, %124, %cst_38 {dimension_numbers = #tpu.dot_dimension_numbers<[1], [0], [0], [1], [0, 0, 1, 1], [], []>} : vector<16x64xbf16>, vector<64x256xbf16>, vector<16x256xf32> -> vector<16x256xf32>
    %126 = arith.mulf %125, %125 : vector<16x256xf32>
    %127 = arith.mulf %125, %126 : vector<16x256xf32>
    %cst_39 = arith.constant 4.471500e-02 : f32
    %128 = vector.broadcast %cst_39 : f32 to vector<16x256xf32>
    %129 = arith.mulf %128, %127 : vector<16x256xf32>
    %130 = arith.addf %125, %129 : vector<16x256xf32>
    %cst_40 = arith.constant 0.797884583 : f32
    %131 = vector.broadcast %cst_40 : f32 to vector<16x256xf32>
    %132 = arith.mulf %131, %130 : vector<16x256xf32>
    %133 = math.tanh %132 : vector<16x256xf32>
    %cst_41 = arith.constant 1.000000e+00 : f32
    %134 = vector.broadcast %cst_41 : f32 to vector<16x256xf32>
    %135 = arith.addf %134, %133 : vector<16x256xf32>
    %cst_42 = arith.constant 5.000000e-01 : f32
    %136 = vector.broadcast %cst_42 : f32 to vector<16x256xf32>
    %137 = arith.mulf %136, %135 : vector<16x256xf32>
    %138 = arith.mulf %125, %137 : vector<16x256xf32>
    %139 = arith.truncf %138 : vector<16x256xf32> to vector<16x256xbf16>
    %c0_43 = arith.constant 0 : index
    %c0_44 = arith.constant 0 : index
    %c0_45 = arith.constant 0 : index
    %140 = vector.load %arg9[%c0_43, %c0_44, %c0_45] : memref<1x256x64xbf16, #tpu.memory_space<vmem>>, vector<1x256x64xbf16>
    %141 = vector.shape_cast %140 : vector<1x256x64xbf16> to vector<256x64xbf16>
    %cst_46 = arith.constant dense<0.000000e+00> : vector<16x64xf32>
    %142 = tpu.matmul %139, %141, %cst_46 {dimension_numbers = #tpu.dot_dimension_numbers<[1], [0], [0], [1], [0, 0, 1, 1], [], []>} : vector<16x256xbf16>, vector<256x64xbf16>, vector<16x64xf32> -> vector<16x64xf32>
    %143 = arith.addf %107, %142 : vector<16x64xf32>
    %144 = vector.shape_cast %143 : vector<16x64xf32> to vector<2x8x64xf32>
    %c0_47 = arith.constant 0 : index
    %c0_48 = arith.constant 0 : index
    %c0_49 = arith.constant 0 : index
    %145 = vector.load %arg10[%c0_47, %c0_48, %c0_49] : memref<2x8x64xf32, #tpu.memory_space<vmem>>, vector<2x8x64xf32>
    tpu.vector_store %arg10[%c0_47, %c0_48, %c0_49], %144 {strides = array<i32>} : memref<2x8x64xf32, #tpu.memory_space<vmem>>, vector<2x8x64xf32>,
    return
  }
  func.func @transform_0(%arg0: i32) -> (i32, i32, i32) {
    %c0_i32 = arith.constant 0 : i32
    %c0_i32_0 = arith.constant 0 : i32
    %c0_i32_1 = arith.constant 0 : i32
    %c0_i32_2 = arith.constant 0 : i32
    return %c0_i32, %c0_i32_0, %c0_i32_1 : i32, i32, i32
  }
  func.func @transform_1(%arg0: i32) -> (i32, i32) {
    %c0_i32 = arith.constant 0 : i32
    %c0_i32_0 = arith.constant 0 : i32
    %c0_i32_1 = arith.constant 0 : i32
    return %c0_i32, %c0_i32_0 : i32, i32
  }
  func.func @transform_2(%arg0: i32) -> (i32, i32) {
    %c0_i32 = arith.constant 0 : i32
    %c0_i32_0 = arith.constant 0 : i32
    %c0_i32_1 = arith.constant 0 : i32
    return %c0_i32, %c0_i32_0 : i32, i32
  }
  func.func @transform_3(%arg0: i32) -> (i32, i32, i32) {
    %c0_i32 = arith.constant 0 : i32
    %c0_i32_0 = arith.constant 0 : i32
    %c0_i32_1 = arith.constant 0 : i32
    return %arg0, %c0_i32, %c0_i32_0 : i32, i32, i32
  }
  func.func @transform_4(%arg0: i32) -> (i32, i32, i32, i32) {
    %c0_i32 = arith.constant 0 : i32
    %c0_i32_0 = arith.constant 0 : i32
    %c0_i32_1 = arith.constant 0 : i32
    %c0_i32_2 = arith.constant 0 : i32
    return %arg0, %c0_i32, %c0_i32_0, %c0_i32_1 : i32, i32, i32, i32
  }
  func.func @transform_5(%arg0: i32) -> (i32, i32, i32) {
    %c0_i32 = arith.constant 0 : i32
    %c0_i32_0 = arith.constant 0 : i32
    %c0_i32_1 = arith.constant 0 : i32
    return %arg0, %c0_i32, %c0_i32_0 : i32, i32, i32
  }
  func.func @transform_6(%arg0: i32) -> (i32, i32, i32) {
    %c0_i32 = arith.constant 0 : i32
    %c0_i32_0 = arith.constant 0 : i32
    %c0_i32_1 = arith.constant 0 : i32
    return %arg0, %c0_i32, %c0_i32_0 : i32, i32, i32
  }
  func.func @transform_7(%arg0: i32) -> (i32, i32, i32) {
    %c0_i32 = arith.constant 0 : i32
    %c0_i32_0 = arith.constant 0 : i32
    %c0_i32_1 = arith.constant 0 : i32
    return %arg0, %c0_i32, %c0_i32_0 : i32, i32, i32
  }
  func.func @transform_8(%arg0: i32) -> (i32, i32, i32) {
    %c0_i32 = arith.constant 0 : i32
    %c0_i32_0 = arith.constant 0 : i32
    %c0_i32_1 = arith.constant 0 : i32
    return %arg0, %c0_i32, %c0_i32_0 : i32, i32, i32
  }
  func.func @transform_9(%arg0: i32) -> (i32, i32, i32) {
    %c0_i32 = arith.constant 0 : i32
    %c0_i32_0 = arith.constant 0 : i32
    %c0_i32_1 = arith.constant 0 : i32
    %c0_i32_2 = arith.constant 0 : i32
    return %c0_i32, %c0_i32_0, %c0_i32_1 : i32, i32, i32
  }
}

</mosaic_0001>

<llo_original>
// kernel: autoregressive_model.3
$region0: #{autoregressive_model.3}
  #allocation0 [shape = 'u32[]', space=smem, size = 0x4, offset = 0x4, fixed_abs, tag = 'smem constant byte address 0x4 - core index']
  #allocation1 [shape = 'u32[72,128]{1,0:T(1,128)}', space=vmem, size = 0x9000, scoped, tag = 'internal scratch']
  %s0 = inlined_call_operand.vmem [shape: f32[2,8,64], index: 0, kind: input, shape index: {}]
  %s1 = inlined_call_operand.vmem [shape: f32[1,64], index: 1, kind: input, shape index: {}]
  %s2 = inlined_call_operand.vmem [shape: bf16[64,128], index: 2, kind: input, shape index: {}]
  %s3 = inlined_call_operand.vmem [shape: f32[1,128], index: 3, kind: input, shape index: {}]
  %s4 = inlined_call_operand.vmem [shape: f32[1,128], index: 4, kind: input, shape index: {}]
  %s5 = inlined_call_operand.hbm [shape: f32[2,8,128], index: 5, kind: output, shape index: {}]
  %s6 = sld [smem:[#allocation0]]
  $region30: #{autoregressive_model.3} parent=0
    _
  %s8 = ssub.s32 1, %s6
  %s9 = scalar_select 0, %s8, %s6
  $region1: #{autoregressive_model.3} parent=0
    #allocation2 [shape = 'u8[8192]{0}', space=vmem, size = 0x2000, scoped, tag = 'output window, operand 0, single buffered']
    #allocation3 [shape = 's32[1]{0}', space=sflag, size = 0x4, scoped, tag = 'scoped memory for autoregressive_model.3']
    %10 = vsyncpa [#allocation3], 0
    // Predicated region
    $region2: #{autoregressive_model.3} parent=1 // pred_check
      _
    $region3: #{autoregressive_model.3} parent=1 // pred_check_branch
      %12 = sbr.rel (0) target = $region5
    $region4: #{autoregressive_model.3} parent=1 // pred_region
      _
    $region5: #{autoregressive_model.3} parent=1 // pred_fallthru
      _
    // Predicated region
    $region6: #{autoregressive_model.3} parent=1 // pred_check
      _
    $region7: #{autoregressive_model.3} parent=1 // pred_check_branch
      %14 = sbr.rel (0) target = $region9
    $region8: #{autoregressive_model.3} parent=1 // pred_region
      _
    $region9: #{autoregressive_model.3} parent=1 // pred_fallthru
      _
    // Predicated region
    $region10: #{autoregressive_model.3} parent=1 // pred_check
      _
    $region11: #{autoregressive_model.3} parent=1 // pred_check_branch
      %16 = sbr.rel (0) target = $region13
    $region12: #{autoregressive_model.3} parent=1 // pred_region
      _
    $region13: #{autoregressive_model.3} parent=1 // pred_fallthru
      _
    // Predicated region
    $region14: #{autoregressive_model.3} parent=1 // pred_check
      _
    $region15: #{autoregressive_model.3} parent=1 // pred_check_branch
      %18 = sbr.rel (0) target = $region17
    $region16: #{autoregressive_model.3} parent=1 // pred_region
      _
    $region17: #{autoregressive_model.3} parent=1 // pred_fallthru
      _
    // Predicated region
    $region18: #{autoregressive_model.3} parent=1 // pred_check
      _
    $region19: #{autoregressive_model.3} parent=1 // pred_check_branch
      %20 = sbr.rel (0) target = $region21
    $region20: #{autoregressive_model.3} parent=1 // pred_region
      _
    $region21: #{autoregressive_model.3} parent=1 // pred_fallthru
      _
    %v22 = vld [vmem:[%s0] sm:$0xff]
    %v23 = vld [vmem:[%s0 + $0x8] sm:$0xff]
    %v24 = vld [vmem:[%s1] sm:$0x1]
    %v25 = vmul.f32 %v22, %v22
    %v26 = vmul.f32 %v23, %v23
    %vm27 = vcmask 523264
    %v28 = vsel %vm27, %v25, 0.0
    %29 = vadd.xlane.f32.xlu0 %v28
    %v30 = vpop.xlane.xlu0 %29
    %v31 = vsel %vm27, %v26, 0.0
    %32 = vadd.xlane.f32.xlu0 %v31
    %v33 = vpop.xlane.xlu0 %32
    %v34 = vrcp.pop 64.0
    %v35 = vmul.f32 64.0, %v34
    %v36 = vsub.f32 1.0, %v35
    %v37 = vmul.f32 %v34, %v36
    %v38 = vadd.f32 %v34, %v37
    %vm39 = vweird.f32 %v34
    %v40 = vsel %vm39, %v34, %v38
    %v41 = vmul.f32 %v30, %v40
    %v42 = vmul.f32 %v33, %v40
    %v43 = vadd.f32 %v41, 1e-05
    %v44 = vadd.f32 %v42, 1e-05
    %v45 = vrsqrt.pop %v43
    %v46 = vmul.f32 %v45, %v43
    %v47 = vmul.f32 %v46, %v45
    %v48 = vmul.f32 0.5, %v47
    %v49 = vsub.f32 1.5, %v48
    %v50 = vmul.f32 %v45, %v49
    %vm51 = vweird.f32 %v43
    %vm52 = vweird.f32 %v45
    %vm53 = vmor %vm51, %vm52
    %v54 = vsel %vm53, %v45, %v50
    %v55 = vrsqrt.pop %v44
    %v56 = vmul.f32 %v55, %v44
    %v57 = vmul.f32 %v56, %v55
    %v58 = vmul.f32 0.5, %v57
    %v59 = vsub.f32 1.5, %v58
    %v60 = vmul.f32 %v55, %v59
    %vm61 = vweird.f32 %v44
    %vm62 = vweird.f32 %v55
    %vm63 = vmor %vm61, %vm62
    %v64 = vsel %vm63, %v55, %v60
    %v65 = vmul.f32 %v22, %v54
    %v66 = vmul.f32 %v23, %v64
    %v68 = vperm.slane %v24, 0
    %v70 = vmul.f32 %v65, %v68
    %v71 = vmul.f32 %v66, %v68
    %v72 = vpack.c.bf16 %v71, %v70
    %v73 = vld [vmem:[%s2] sm:$0xf]
    %v74 = vld [vmem:[%s2 + $0x4] sm:$0xf]
    %v75 = vld [vmem:[%s2 + $0x8] sm:$0xf]
    %v76 = vld [vmem:[%s2 + $0xc] sm:$0xf]
    %v77 = vld [vmem:[%s2 + $0x10] sm:$0xf]
    %v78 = vld [vmem:[%s2 + $0x14] sm:$0xf]
    %v79 = vld [vmem:[%s2 + $0x18] sm:$0xf]
    %v80 = vld [vmem:[%s2 + $0x1c] sm:$0xf]
    %v81 = vld [vmem:[%s3] sm:$0x1]
    %v83 = vperm.slane %v81, 0
    %v93 = vunpack.c.l.b16 %v73
    %v94 = vunpack.c.l.b16 %v74
    %v95 = vunpack.c.l.b16 %v75
    %v96 = vunpack.c.l.b16 %v76
    %v97 = vunpack.c.l.b16 %v77
    %v98 = vunpack.c.l.b16 %v78
    %v99 = vunpack.c.l.b16 %v79
    %v100 = vunpack.c.l.b16 %v80
    %v101 = vpack.c.b16 %v94, %v93
    %v102 = vpack.c.b16 %v96, %v95
    %v103 = vpack.c.b16 %v98, %v97
    %v104 = vpack.c.b16 %v100, %v99
    %v110 = vsel %vm27, %v72, 0
    %112 = vmatpush.bf16.msra.mxu0 0
    %113 = vmatpush.bf16.msra.mxu0 0
    %114 = vmatpush.bf16.msra.mxu0 0
    %115 = vmatpush.bf16.msra.mxu0 0
    %116 = vmatpush.bf16.msra.mxu0 %v104
    %117 = vmatpush.bf16.msra.mxu0 %v103
    %118 = vmatpush.bf16.msra.mxu0 %v102
    %119 = vmatpush.bf16.msra.mxu0 %v101
    %120 = vmatmul.bf16.gmra.mxu0 %v110
    %v121 = vpop.f32.mrf.mxu0
    %v122 = vadd.f32 %v83, %v121
    %v123 = vpop.f32.mrf.mxu0
    %v124 = vadd.f32 %v83, %v123
    %125 = vdwg.mxu0
    %v126 = vld [vmem:[%s4] sm:$0x1]
    %v129 = vrot.slane %v122, 7
    %v130 = vrot.slane %v124, 7
    %vm133 = vcmask 1040384
    %v134 = vsel %vm133, %v126, %v129
    %v135 = vsel %vm133, %v126, %v130
    %136 = vst [vmem:[#allocation2] sm:$0xff] %v134
    %137 = vst [vmem:[#allocation2 + $0x8] sm:$0xff] %v135
    // Predicated region
    $region22: #{autoregressive_model.3} parent=1 // pred_check
      _
    $region23: #{autoregressive_model.3} parent=1 // pred_check_branch
      %139 = sbr.rel (0) target = $region25
    $region24: #{autoregressive_model.3} parent=1 // pred_region
      %141 = vsyncadd [#allocation3], 0
      %s142 = sshll.u32 [#allocation2], 4
      %s143 = int_to_ptr.vmem [resolvable:$true] %s142
      %s144 = sshll.u32 %s5, 4
      %s145 = int_to_ptr.hbm [resolvable:$true] %s144
      %150 = dma.vmem_to_hbm [thread:$0]  %s143, 256, %s145, [#allocation3], 128, 128, 8
    $region25: #{autoregressive_model.3} parent=1 // pred_fallthru
      _
    // Predicated region
    $region26: #{autoregressive_model.3} parent=1 // pred_check
      _
    $region27: #{autoregressive_model.3} parent=1 // pred_check_branch
      %152 = sbr.rel (0) target = $region29
    $region28: #{autoregressive_model.3} parent=1 // pred_region
      %154 = dma.done [#allocation3], 256
    $region29: #{autoregressive_model.3} parent=1 // pred_fallthru
      _
    %155 = vsyncpa [#allocation3], 1

// kernel: autoregressive_model.2
$region0: #{autoregressive_model.2}
  #allocation0 [shape = 'u32[]', space=smem, size = 0x4, offset = 0x4, fixed_abs, tag = 'smem constant byte address 0x4 - core index']
  #allocation1 [shape = 'u32[72,128]{1,0:T(1,128)}', space=vmem, size = 0x9000, scoped, tag = 'internal scratch']
  %s0 = inlined_call_operand.vmem [shape: f32[2,8,64], index: 0, kind: input, shape index: {}]
  %s1 = inlined_call_operand.vmem [shape: f32[8,16], index: 1, kind: input, shape index: {}]
  %s2 = inlined_call_operand.vmem [shape: f32[8,16], index: 2, kind: input, shape index: {}]
  %s3 = inlined_call_operand.vmem [shape: bf16[2,64,192], index: 3, kind: input, shape index: {}]
  %s4 = inlined_call_operand.vmem [shape: bf16[2,4,16,64], index: 4, kind: input, shape index: {}]
  %s5 = inlined_call_operand.vmem [shape: f32[2,1,64], index: 5, kind: input, shape index: {}]
  %s6 = inlined_call_operand.vmem [shape: f32[2,1,64], index: 6, kind: input, shape index: {}]
  %s7 = inlined_call_operand.vmem [shape: bf16[2,64,256], index: 7, kind: input, shape index: {}]
  %s8 = inlined_call_operand.vmem [shape: bf16[2,256,64], index: 8, kind: input, shape index: {}]
  %s9 = inlined_call_operand.vmem [shape: f32[2,8,64], index: 9, kind: output, shape index: {}]
  %s10 = sld [smem:[#allocation0]]
  $region73: #{autoregressive_model.2} parent=0
    _
  %s12 = ssub.s32 1, %s10
  %s13 = scalar_select 0, %s12, %s10
  loop: start=0, step=1, limit=4
  $region2: #{autoregressive_model.2} parent=0 // loop_pre_header
    _
  $region3: #{autoregressive_model.2} parent=0 // loop_header
    %s15 = sphi 0, %s19
    %p16 = scmp.ge.s32.totalorder %s15, 4
    %s23 = sphi 0, %s23
    %s25 = sphi 0, %s23
    %s26 = sphi 0, %s25
    %s40 = sphi 0, %s26
    %s44 = sphi 0, %s44
    %s46 = sphi 0, %s44
    %s47 = sphi 0, %s46
    %s61 = sphi 0, %s47
    %s65 = sphi 0, %s65
    %s67 = sphi 0, %s65
    %s68 = sphi 0, %s67
    %s82 = sphi 0, %s68
    %s88 = sphi 0, %s90
    %s91 = sphi 0, %s88
    %s92 = sphi 0, %s91
    %s108 = sphi 0, %s92
    %s114 = sphi 0, %s116
    %s117 = sphi 0, %s114
    %s118 = sphi 0, %s117
    %s134 = sphi 0, %s118
    %s140 = sphi 0, %s142
    %s143 = sphi 0, %s140
    %s144 = sphi 0, %s143
    %s160 = sphi 0, %s144
    %s166 = sphi 0, %s168
    %s169 = sphi 0, %s166
    %s170 = sphi 0, %s169
    %s186 = sphi 0, %s170
    %s192 = sphi 0, %s194
    %s195 = sphi 0, %s192
    %s196 = sphi 0, %s195
    %s212 = sphi 0, %s196
    %s218 = sphi 0, %s220
    %s221 = sphi 0, %s218
    %s222 = sphi 0, %s221
    %s238 = sphi 0, %s222
    %s242 = sphi 0, %s242
    %s244 = sphi 0, %s242
    %s245 = sphi 0, %s244
    %s259 = sphi 0, %s245
  $region4: #{autoregressive_model.2} parent=0 // loop_header_branch
    %18 = sbr.rel (%p16) target = $region8
  $region5: #{autoregressive_model.2} parent=0 // loop_body
    %s20 = ssub.s32 %s15, 1
    %s21 = ssub.s32 %s15, 2
    %s22 = sadd.s32 %s15, 1
    %s24 = sadd.s32 %s23, 1
    %p27 = scmp.eq.s32.totalorder %s15, 1
    %p28 = scmp.ne.s32.totalorder %s23, %s25
    %p29 = scmp.eq.s32.totalorder %s15, 0
    %p30 = por %p28, %p29
    %p31 = scmp.ne.s32.totalorder %s23, %s25
    %p32 = scmp.eq.s32.totalorder %s20, 1
    %p33 = por %p31, %p32
    %p34 = scmp.ne.s32.totalorder %s25, %s26
    %p35 = scmp.eq.s32.totalorder %s20, 0
    %p36 = por %p34, %p35
    %p37 = scmp.ne.s32.totalorder %s25, %s26
    %p38 = scmp.eq.s32.totalorder %s21, 1
    %p39 = por %p37, %p38
    %p41 = scmp.ne.s32.totalorder %s26, %s40
    %p42 = scmp.eq.s32.totalorder %s21, 0
    %p43 = por %p41, %p42
    %s45 = sadd.s32 %s44, 1
    %p48 = scmp.eq.s32.totalorder %s15, 1
    %p49 = scmp.ne.s32.totalorder %s44, %s46
    %p50 = scmp.eq.s32.totalorder %s15, 0
    %p51 = por %p49, %p50
    %p52 = scmp.ne.s32.totalorder %s44, %s46
    %p53 = scmp.eq.s32.totalorder %s20, 1
    %p54 = por %p52, %p53
    %p55 = scmp.ne.s32.totalorder %s46, %s47
    %p56 = scmp.eq.s32.totalorder %s20, 0
    %p57 = por %p55, %p56
    %p58 = scmp.ne.s32.totalorder %s46, %s47
    %p59 = scmp.eq.s32.totalorder %s21, 1
    %p60 = por %p58, %p59
    %p62 = scmp.ne.s32.totalorder %s47, %s61
    %p63 = scmp.eq.s32.totalorder %s21, 0
    %p64 = por %p62, %p63
    %s66 = sadd.s32 %s65, 1
    %p69 = scmp.eq.s32.totalorder %s15, 1
    %p70 = scmp.ne.s32.totalorder %s65, %s67
    %p71 = scmp.eq.s32.totalorder %s15, 0
    %p72 = por %p70, %p71
    %p73 = scmp.ne.s32.totalorder %s65, %s67
    %p74 = scmp.eq.s32.totalorder %s20, 1
    %p75 = por %p73, %p74
    %p76 = scmp.ne.s32.totalorder %s67, %s68
    %p77 = scmp.eq.s32.totalorder %s20, 0
    %p78 = por %p76, %p77
    %p79 = scmp.ne.s32.totalorder %s67, %s68
    %p80 = scmp.eq.s32.totalorder %s21, 1
    %p81 = por %p79, %p80
    %p83 = scmp.ne.s32.totalorder %s68, %s82
    %p84 = scmp.eq.s32.totalorder %s21, 0
    %p85 = por %p83, %p84
    %s86 = ssub.s32 %s15, %s22
    %p87 = scmp.eq.s32.totalorder %s86, 0
    %s89 = sadd.s32 %s88, 1
    %s90 = scalar_select %p87, %s88, %s89
    %p93 = pneg %p87
    %p94 = scmp.eq.s32.totalorder %s15, 1
    %p95 = por %p93, %p94
    %p96 = scmp.ne.s32.totalorder %s88, %s91
    %p97 = scmp.eq.s32.totalorder %s15, 0
    %p98 = por %p96, %p97
    %p99 = scmp.ne.s32.totalorder %s88, %s91
    %p100 = scmp.eq.s32.totalorder %s20, 1
    %p101 = por %p99, %p100
    %p102 = scmp.ne.s32.totalorder %s91, %s92
    %p103 = scmp.eq.s32.totalorder %s20, 0
    %p104 = por %p102, %p103
    %p105 = scmp.ne.s32.totalorder %s91, %s92
    %p106 = scmp.eq.s32.totalorder %s21, 1
    %p107 = por %p105, %p106
    %p109 = scmp.ne.s32.totalorder %s92, %s108
    %p110 = scmp.eq.s32.totalorder %s21, 0
    %p111 = por %p109, %p110
    %s112 = ssub.s32 %s15, %s22
    %p113 = scmp.eq.s32.totalorder %s112, 0
    %s115 = sadd.s32 %s114, 1
    %s116 = scalar_select %p113, %s114, %s115
    %p119 = pneg %p113
    %p120 = scmp.eq.s32.totalorder %s15, 1
    %p121 = por %p119, %p120
    %p122 = scmp.ne.s32.totalorder %s114, %s117
    %p123 = scmp.eq.s32.totalorder %s15, 0
    %p124 = por %p122, %p123
    %p125 = scmp.ne.s32.totalorder %s114, %s117
    %p126 = scmp.eq.s32.totalorder %s20, 1
    %p127 = por %p125, %p126
    %p128 = scmp.ne.s32.totalorder %s117, %s118
    %p129 = scmp.eq.s32.totalorder %s20, 0
    %p130 = por %p128, %p129
    %p131 = scmp.ne.s32.totalorder %s117, %s118
    %p132 = scmp.eq.s32.totalorder %s21, 1
    %p133 = por %p131, %p132
    %p135 = scmp.ne.s32.totalorder %s118, %s134
    %p136 = scmp.eq.s32.totalorder %s21, 0
    %p137 = por %p135, %p136
    %s138 = ssub.s32 %s15, %s22
    %p139 = scmp.eq.s32.totalorder %s138, 0
    %s141 = sadd.s32 %s140, 1
    %s142 = scalar_select %p139, %s140, %s141
    %p145 = pneg %p139
    %p146 = scmp.eq.s32.totalorder %s15, 1
    %p147 = por %p145, %p146
    %p148 = scmp.ne.s32.totalorder %s140, %s143
    %p149 = scmp.eq.s32.totalorder %s15, 0
    %p150 = por %p148, %p149
    %p151 = scmp.ne.s32.totalorder %s140, %s143
    %p152 = scmp.eq.s32.totalorder %s20, 1
    %p153 = por %p151, %p152
    %p154 = scmp.ne.s32.totalorder %s143, %s144
    %p155 = scmp.eq.s32.totalorder %s20, 0
    %p156 = por %p154, %p155
    %p157 = scmp.ne.s32.totalorder %s143, %s144
    %p158 = scmp.eq.s32.totalorder %s21, 1
    %p159 = por %p157, %p158
    %p161 = scmp.ne.s32.totalorder %s144, %s160
    %p162 = scmp.eq.s32.totalorder %s21, 0
    %p163 = por %p161, %p162
    %s164 = ssub.s32 %s15, %s22
    %p165 = scmp.eq.s32.totalorder %s164, 0
    %s167 = sadd.s32 %s166, 1
    %s168 = scalar_select %p165, %s166, %s167
    %p171 = pneg %p165
    %p172 = scmp.eq.s32.totalorder %s15, 1
    %p173 = por %p171, %p172
    %p174 = scmp.ne.s32.totalorder %s166, %s169
    %p175 = scmp.eq.s32.totalorder %s15, 0
    %p176 = por %p174, %p175
    %p177 = scmp.ne.s32.totalorder %s166, %s169
    %p178 = scmp.eq.s32.totalorder %s20, 1
    %p179 = por %p177, %p178
    %p180 = scmp.ne.s32.totalorder %s169, %s170
    %p181 = scmp.eq.s32.totalorder %s20, 0
    %p182 = por %p180, %p181
    %p183 = scmp.ne.s32.totalorder %s169, %s170
    %p184 = scmp.eq.s32.totalorder %s21, 1
    %p185 = por %p183, %p184
    %p187 = scmp.ne.s32.totalorder %s170, %s186
    %p188 = scmp.eq.s32.totalorder %s21, 0
    %p189 = por %p187, %p188
    %s190 = ssub.s32 %s15, %s22
    %p191 = scmp.eq.s32.totalorder %s190, 0
    %s193 = sadd.s32 %s192, 1
    %s194 = scalar_select %p191, %s192, %s193
    %p197 = pneg %p191
    %p198 = scmp.eq.s32.totalorder %s15, 1
    %p199 = por %p197, %p198
    %p200 = scmp.ne.s32.totalorder %s192, %s195
    %p201 = scmp.eq.s32.totalorder %s15, 0
    %p202 = por %p200, %p201
    %p203 = scmp.ne.s32.totalorder %s192, %s195
    %p204 = scmp.eq.s32.totalorder %s20, 1
    %p205 = por %p203, %p204
    %p206 = scmp.ne.s32.totalorder %s195, %s196
    %p207 = scmp.eq.s32.totalorder %s20, 0
    %p208 = por %p206, %p207
    %p209 = scmp.ne.s32.totalorder %s195, %s196
    %p210 = scmp.eq.s32.totalorder %s21, 1
    %p211 = por %p209, %p210
    %p213 = scmp.ne.s32.totalorder %s196, %s212
    %p214 = scmp.eq.s32.totalorder %s21, 0
    %p215 = por %p213, %p214
    %s216 = ssub.s32 %s15, %s22
    %p217 = scmp.eq.s32.totalorder %s216, 0
    %s219 = sadd.s32 %s218, 1
    %s220 = scalar_select %p217, %s218, %s219
    %p223 = pneg %p217
    %p224 = scmp.eq.s32.totalorder %s15, 1
    %p225 = por %p223, %p224
    %p226 = scmp.ne.s32.totalorder %s218, %s221
    %p227 = scmp.eq.s32.totalorder %s15, 0
    %p228 = por %p226, %p227
    %p229 = scmp.ne.s32.totalorder %s218, %s221
    %p230 = scmp.eq.s32.totalorder %s20, 1
    %p231 = por %p229, %p230
    %p232 = scmp.ne.s32.totalorder %s221, %s222
    %p233 = scmp.eq.s32.totalorder %s20, 0
    %p234 = por %p232, %p233
    %p235 = scmp.ne.s32.totalorder %s221, %s222
    %p236 = scmp.eq.s32.totalorder %s21, 1
    %p237 = por %p235, %p236
    %p239 = scmp.ne.s32.totalorder %s222, %s238
    %p240 = scmp.eq.s32.totalorder %s21, 0
    %p241 = por %p239, %p240
    %s243 = sadd.s32 %s242, 1
    %p246 = scmp.eq.s32.totalorder %s15, 1
    %p247 = scmp.ne.s32.totalorder %s242, %s244
    %p248 = scmp.eq.s32.totalorder %s15, 0
    %p249 = por %p247, %p248
    %p250 = scmp.ne.s32.totalorder %s242, %s244
    %p251 = scmp.eq.s32.totalorder %s20, 1
    %p252 = por %p250, %p251
    %p253 = scmp.ne.s32.totalorder %s244, %s245
    %p254 = scmp.eq.s32.totalorder %s20, 0
    %p255 = por %p253, %p254
    %p256 = scmp.ne.s32.totalorder %s244, %s245
    %p257 = scmp.eq.s32.totalorder %s21, 1
    %p258 = por %p256, %p257
    %p260 = scmp.ne.s32.totalorder %s245, %s259
    %p261 = scmp.eq.s32.totalorder %s21, 0
    %p262 = por %p260, %p261
    %p263 = scmp.le.s32.totalorder 1, %s15
    %p264 = scmp.lt.s32.totalorder %s15, 3
    %p265 = pnand %p263, %p264
    %p266 = pneg %p265
    // Predicated region
    $region9: #{autoregressive_model.2} parent=5 // pred_check
      _
    $region10: #{autoregressive_model.2} parent=5 // pred_check_branch
      %268 = sbr.rel (%p265) target = $region12
    $region11: #{autoregressive_model.2} parent=5 // pred_region
      %s269 = ssub.s32 %s15, 1
      // Predicated region
      $region13: #{autoregressive_model.2} parent=11 // pred_check
        %p270 = pneg %p36
      $region14: #{autoregressive_model.2} parent=11 // pred_check_branch
        %272 = sbr.rel (%p270) target = $region16
      $region15: #{autoregressive_model.2} parent=11 // pred_region
        _
      $region16: #{autoregressive_model.2} parent=11 // pred_fallthru
        _
      // Predicated region
      $region17: #{autoregressive_model.2} parent=11 // pred_check
        %p273 = pneg %p57
      $region18: #{autoregressive_model.2} parent=11 // pred_check_branch
        %275 = sbr.rel (%p273) target = $region20
      $region19: #{autoregressive_model.2} parent=11 // pred_region
        _
      $region20: #{autoregressive_model.2} parent=11 // pred_fallthru
        _
      // Predicated region
      $region21: #{autoregressive_model.2} parent=11 // pred_check
        %p276 = pneg %p78
      $region22: #{autoregressive_model.2} parent=11 // pred_check_branch
        %278 = sbr.rel (%p276) target = $region24
      $region23: #{autoregressive_model.2} parent=11 // pred_region
        _
      $region24: #{autoregressive_model.2} parent=11 // pred_fallthru
        _
    $region12: #{autoregressive_model.2} parent=5 // pred_fallthru
      _
    %p279 = scmp.lt.s32.totalorder %s15, 2
    // Predicated region
    $region25: #{autoregressive_model.2} parent=5 // pred_check
      %p280 = pneg %p279
    $region26: #{autoregressive_model.2} parent=5 // pred_check_branch
      %282 = sbr.rel (%p280) target = $region28
    $region27: #{autoregressive_model.2} parent=5 // pred_region
      // Predicated region
      $region29: #{autoregressive_model.2} parent=27 // pred_check
        %p283 = pneg %p98
      $region30: #{autoregressive_model.2} parent=27 // pred_check_branch
        %285 = sbr.rel (%p283) target = $region32
      $region31: #{autoregressive_model.2} parent=27 // pred_region
        %p286 = scmp.lt.s32.totalorder %s15, 1
        %s287 = scalar_select %p286, %s15, 1
        %s288 = smul.addr %s287, 16
        %s289 = smul.addr %s288, 4
        %s290 = scalar_lea.vmem %s3, %s289
      $region32: #{autoregressive_model.2} parent=27 // pred_fallthru
        _
      // Predicated region
      $region33: #{autoregressive_model.2} parent=27 // pred_check
        %p291 = pneg %p124
      $region34: #{autoregressive_model.2} parent=27 // pred_check_branch
        %293 = sbr.rel (%p291) target = $region36
      $region35: #{autoregressive_model.2} parent=27 // pred_region
        %p294 = scmp.lt.s32.totalorder %s15, 1
        %s295 = scalar_select %p294, %s15, 1
        %s296 = smul.addr %s295, 8
        %s297 = smul.addr %s296, 4
        %s298 = scalar_lea.vmem %s4, %s297
      $region36: #{autoregressive_model.2} parent=27 // pred_fallthru
        _
      // Predicated region
      $region37: #{autoregressive_model.2} parent=27 // pred_check
        %p299 = pneg %p150
      $region38: #{autoregressive_model.2} parent=27 // pred_check_branch
        %301 = sbr.rel (%p299) target = $region40
      $region39: #{autoregressive_model.2} parent=27 // pred_region
        %p302 = scmp.lt.s32.totalorder %s15, 1
        %s303 = scalar_select %p302, %s15, 1
        %s304 = scalar_lea.vmem %s5, %s303
      $region40: #{autoregressive_model.2} parent=27 // pred_fallthru
        _
      // Predicated region
      $region41: #{autoregressive_model.2} parent=27 // pred_check
        %p305 = pneg %p176
      $region42: #{autoregressive_model.2} parent=27 // pred_check_branch
        %307 = sbr.rel (%p305) target = $region44
      $region43: #{autoregressive_model.2} parent=27 // pred_region
        %p308 = scmp.lt.s32.totalorder %s15, 1
        %s309 = scalar_select %p308, %s15, 1
        %s310 = scalar_lea.vmem %s6, %s309
      $region44: #{autoregressive_model.2} parent=27 // pred_fallthru
        _
      // Predicated region
      $region45: #{autoregressive_model.2} parent=27 // pred_check
        %p311 = pneg %p202
      $region46: #{autoregressive_model.2} parent=27 // pred_check_branch
        %313 = sbr.rel (%p311) target = $region48
      $region47: #{autoregressive_model.2} parent=27 // pred_region
        %p314 = scmp.lt.s32.totalorder %s15, 1
        %s315 = scalar_select %p314, %s15, 1
        %s316 = smul.addr %s315, 16
        %s317 = smul.addr %s316, 4
        %s318 = scalar_lea.vmem %s7, %s317
      $region48: #{autoregressive_model.2} parent=27 // pred_fallthru
        _
      // Predicated region
      $region49: #{autoregressive_model.2} parent=27 // pred_check
        %p319 = pneg %p228
      $region50: #{autoregressive_model.2} parent=27 // pred_check_branch
        %321 = sbr.rel (%p319) target = $region52
      $region51: #{autoregressive_model.2} parent=27 // pred_region
        %p322 = scmp.lt.s32.totalorder %s15, 1
        %s323 = scalar_select %p322, %s15, 1
        %s324 = smul.addr %s323, 32
        %s325 = smul.addr %s324, 4
        %s326 = scalar_lea.vmem %s8, %s325
      $region52: #{autoregressive_model.2} parent=27 // pred_fallthru
        _
    $region28: #{autoregressive_model.2} parent=5 // pred_fallthru
      _
    %p327 = scmp.le.s32.totalorder 1, %s15
    %p328 = scmp.lt.s32.totalorder %s15, 3
    %p329 = pnand %p327, %p328
    %p330 = pneg %p329
    // Predicated region
    $region53: #{autoregressive_model.2} parent=5 // pred_check
      _
    $region54: #{autoregressive_model.2} parent=5 // pred_check_branch
      %332 = sbr.rel (%p329) target = $region56
    $region55: #{autoregressive_model.2} parent=5 // pred_region
      %s333 = ssub.s32 %s15, 1
      %p334 = pneg %p36
      %p335 = pneg %p33
      %p336 = pneg %p57
      %p337 = pneg %p54
      %p338 = pneg %p78
      %p339 = pneg %p75
      %p340 = scmp.lt.s32.totalorder %s20, 1
      %s341 = scalar_select %p340, %s20, 1
      %s342 = smul.addr %s341, 16
      %s343 = smul.addr %s342, 4
      %s344 = scalar_lea.vmem %s3, %s343
      %p345 = pneg %p104
      %p346 = pneg %p101
      %p347 = scmp.lt.s32.totalorder %s20, 1
      %s348 = scalar_select %p347, %s20, 1
      %s349 = smul.addr %s348, 8
      %s350 = smul.addr %s349, 4
      %s351 = scalar_lea.vmem %s4, %s350
      %p352 = pneg %p130
      %p353 = pneg %p127
      %p354 = scmp.lt.s32.totalorder %s20, 1
      %s355 = scalar_select %p354, %s20, 1
      %s356 = scalar_lea.vmem %s5, %s355
      %p357 = pneg %p156
      %p358 = pneg %p153
      %p359 = scmp.lt.s32.totalorder %s20, 1
      %s360 = scalar_select %p359, %s20, 1
      %s361 = scalar_lea.vmem %s6, %s360
      %p362 = pneg %p182
      %p363 = pneg %p179
      %p364 = scmp.lt.s32.totalorder %s20, 1
      %s365 = scalar_select %p364, %s20, 1
      %s366 = smul.addr %s365, 16
      %s367 = smul.addr %s366, 4
      %s368 = scalar_lea.vmem %s7, %s367
      %p369 = pneg %p208
      %p370 = pneg %p205
      %p371 = scmp.lt.s32.totalorder %s20, 1
      %s372 = scalar_select %p371, %s20, 1
      %s373 = smul.addr %s372, 32
      %s374 = smul.addr %s373, 4
      %s375 = scalar_lea.vmem %s8, %s374
      %p376 = pneg %p234
      %p377 = pneg %p231
      %p378 = pneg %p255
      %p379 = pneg %p252
      %p380 = scmp.lt.s32.totalorder %s20, 1
      %s381 = scalar_select %p380, %s20, 1
      %s382 = smul.addr %s381, 16
      %s383 = smul.addr %s382, 4
      %s384 = scalar_lea.vmem %s3, %s383
      %p385 = scmp.lt.s32.totalorder %s20, 1
      %s386 = scalar_select %p385, %s20, 1
      %s387 = smul.addr %s386, 8
      %s388 = smul.addr %s387, 4
      %s389 = scalar_lea.vmem %s4, %s388
      %p390 = scmp.lt.s32.totalorder %s20, 1
      %s391 = scalar_select %p390, %s20, 1
      %s392 = scalar_lea.vmem %s5, %s391
      %p393 = scmp.lt.s32.totalorder %s20, 1
      %s394 = scalar_select %p393, %s20, 1
      %s395 = scalar_lea.vmem %s6, %s394
      %p396 = scmp.lt.s32.totalorder %s20, 1
      %s397 = scalar_select %p396, %s20, 1
      %s398 = smul.addr %s397, 16
      %s399 = smul.addr %s398, 4
      %s400 = scalar_lea.vmem %s7, %s399
      %p401 = scmp.lt.s32.totalorder %s20, 1
      %s402 = scalar_select %p401, %s20, 1
      %s403 = smul.addr %s402, 32
      %s404 = smul.addr %s403, 4
      %s405 = scalar_lea.vmem %s8, %s404
      %p407 = scmp.eq.s32.totalorder %s20, 0
      // Predicated region
      $region57: #{autoregressive_model.2} parent=55 // pred_check
        %p408 = pneg %p407
      $region58: #{autoregressive_model.2} parent=55 // pred_check_branch
        %410 = sbr.rel (%p408) target = $region60
      $region59: #{autoregressive_model.2} parent=55 // pred_region
        %v411 = vld [vmem:[%s0] sm:$0xff]
        %v412 = vld [vmem:[%s0 + $0x8] sm:$0xff]
        %vm413 = vcmask 523264
        %414 = vst.msk [vmem:[%s9] sm:$0xff] %vm413, %v411
        %415 = vst.msk [vmem:[%s9 + $0x8] sm:$0xff] %vm413, %v412
      $region60: #{autoregressive_model.2} parent=55 // pred_fallthru
        _
      %v416 = vld [vmem:[%s9] sm:$0xff]
      %v417 = vld [vmem:[%s9 + $0x8] sm:$0xff]
      %v418 = vld [vmem:[%s392] sm:$0x1]
      %v419 = vmul.f32 %v416, %v416
      %v420 = vmul.f32 %v417, %v417
      %vm421 = vcmask 523264
      %v422 = vsel %vm421, %v419, 0.0
      %423 = vadd.xlane.f32.xlu0 %v422
      %v424 = vpop.xlane.xlu0 %423
      %v425 = vsel %vm421, %v420, 0.0
      %426 = vadd.xlane.f32.xlu0 %v425
      %v427 = vpop.xlane.xlu0 %426
      %v428 = vrcp.pop 64.0
      %v429 = vmul.f32 64.0, %v428
      %v430 = vsub.f32 1.0, %v429
      %v431 = vmul.f32 %v428, %v430
      %v432 = vadd.f32 %v428, %v431
      %vm433 = vweird.f32 %v428
      %v434 = vsel %vm433, %v428, %v432
      %v435 = vmul.f32 %v424, %v434
      %v436 = vmul.f32 %v427, %v434
      %v437 = vadd.f32 %v435, 1e-05
      %v438 = vadd.f32 %v436, 1e-05
      %v439 = vrsqrt.pop %v437
      %v440 = vmul.f32 %v439, %v437
      %v441 = vmul.f32 %v440, %v439
      %v442 = vmul.f32 0.5, %v441
      %v443 = vsub.f32 1.5, %v442
      %v444 = vmul.f32 %v439, %v443
      %vm445 = vweird.f32 %v437
      %vm446 = vweird.f32 %v439
      %vm447 = vmor %vm445, %vm446
      %v448 = vsel %vm447, %v439, %v444
      %v449 = vrsqrt.pop %v438
      %v450 = vmul.f32 %v449, %v438
      %v451 = vmul.f32 %v450, %v449
      %v452 = vmul.f32 0.5, %v451
      %v453 = vsub.f32 1.5, %v452
      %v454 = vmul.f32 %v449, %v453
      %vm455 = vweird.f32 %v438
      %vm456 = vweird.f32 %v449
      %vm457 = vmor %vm455, %vm456
      %v458 = vsel %vm457, %v449, %v454
      %v459 = vmul.f32 %v416, %v448
      %v460 = vmul.f32 %v417, %v458
      %v462 = vperm.slane %v418, 0
      %v464 = vmul.f32 %v459, %v462
      %v465 = vmul.f32 %v460, %v462
      %v466 = vpack.c.bf16 %v465, %v464
      %v467 = vld [vmem:[%s384] sm:$0xff]
      %v468 = vld [vmem:[%s384 + $0x8] sm:$0xff]
      %v469 = vld [vmem:[%s384 + $0x10] sm:$0xff]
      %v470 = vld [vmem:[%s384 + $0x18] sm:$0xff]
      %v471 = vld [vmem:[%s384 + $0x20] sm:$0xff]
      %v472 = vld [vmem:[%s384 + $0x28] sm:$0xff]
      %v473 = vld [vmem:[%s384 + $0x30] sm:$0xff]
      %v474 = vld [vmem:[%s384 + $0x38] sm:$0xff]
      %v483 = vunpack.c.l.b16 %v467
      %v484 = vunpack.c.h.b16 %v467
      %v485 = vunpack.c.l.b16 %v468
      %v486 = vunpack.c.h.b16 %v468
      %v487 = vunpack.c.l.b16 %v469
      %v488 = vunpack.c.h.b16 %v469
      %v489 = vunpack.c.l.b16 %v470
      %v490 = vunpack.c.h.b16 %v470
      %v491 = vunpack.c.l.b16 %v471
      %v492 = vunpack.c.h.b16 %v471
      %v493 = vunpack.c.l.b16 %v472
      %v494 = vunpack.c.h.b16 %v472
      %v495 = vunpack.c.l.b16 %v473
      %v496 = vunpack.c.h.b16 %v473
      %v497 = vunpack.c.l.b16 %v474
      %v498 = vunpack.c.h.b16 %v474
      %v499 = vpack.c.b16 %v485, %v483
      %v500 = vpack.c.b16 %v486, %v484
      %v501 = vpack.c.b16 %v489, %v487
      %v502 = vpack.c.b16 %v490, %v488
      %v503 = vpack.c.b16 %v493, %v491
      %v504 = vpack.c.b16 %v494, %v492
      %v505 = vpack.c.b16 %v497, %v495
      %v506 = vpack.c.b16 %v498, %v496
      %v516 = vsel %vm421, %v466, 0
      %518 = vmatpush.bf16.msra.mxu0 0
      %519 = vmatpush.bf16.msra.mxu0 0
      %520 = vmatpush.bf16.msra.mxu0 0
      %521 = vmatpush.bf16.msra.mxu0 0
      %522 = vmatpush.bf16.msra.mxu0 %v505
      %523 = vmatpush.bf16.msra.mxu0 %v503
      %524 = vmatpush.bf16.msra.mxu0 %v501
      %525 = vmatpush.bf16.msra.mxu0 %v499
      %526 = vmatmul.bf16.gmra.mxu0 %v516
      %v527 = vpop.f32.mrf.mxu0
      %v528 = vadd.f32 0.0, %v527
      %v529 = vpop.f32.mrf.mxu0
      %v530 = vadd.f32 0.0, %v529
      %531 = vdwg.mxu0
      %532 = vmatpush.bf16.msra.mxu0 0
      %533 = vmatpush.bf16.msra.mxu0 0
      %534 = vmatpush.bf16.msra.mxu0 0
      %535 = vmatpush.bf16.msra.mxu0 0
      %536 = vmatpush.bf16.msra.mxu0 %v506
      %537 = vmatpush.bf16.msra.mxu0 %v504
      %538 = vmatpush.bf16.msra.mxu0 %v502
      %539 = vmatpush.bf16.msra.mxu0 %v500
      %540 = vmatmul.bf16.gmra.mxu0 %v516
      %v541 = vpop.f32.mrf.mxu0
      %v542 = vadd.f32 0.0, %v541
      %v543 = vpop.f32.mrf.mxu0
      %v544 = vadd.f32 0.0, %v543
      %545 = vdwg.mxu0
      %548 = vrot.lane.b32.xlu0 %v528, 112
      %v549 = vpop.permute.xlu0 %548
      %550 = vrot.lane.b32.xlu0 %v530, 112
      %v551 = vpop.permute.xlu0 %550
      %554 = vrot.lane.b32.xlu0 %v528, 96
      %v555 = vpop.permute.xlu0 %554
      %556 = vrot.lane.b32.xlu0 %v530, 96
      %v557 = vpop.permute.xlu0 %556
      %560 = vrot.lane.b32.xlu0 %v528, 80
      %v561 = vpop.permute.xlu0 %560
      %562 = vrot.lane.b32.xlu0 %v530, 80
      %v563 = vpop.permute.xlu0 %562
      %568 = vrot.lane.b32.xlu0 %v542, 112
      %v569 = vpop.permute.xlu0 %568
      %570 = vrot.lane.b32.xlu0 %v544, 112
      %v571 = vpop.permute.xlu0 %570
      %574 = vrot.lane.b32.xlu0 %v542, 96
      %v575 = vpop.permute.xlu0 %574
      %576 = vrot.lane.b32.xlu0 %v544, 96
      %v577 = vpop.permute.xlu0 %576
      %580 = vrot.lane.b32.xlu0 %v542, 80
      %v581 = vpop.permute.xlu0 %580
      %582 = vrot.lane.b32.xlu0 %v544, 80
      %v583 = vpop.permute.xlu0 %582
      %v586 = vld [vmem:[%s1] sm:$0xff]
      %v587 = vld [vmem:[%s2] sm:$0xff]
      %v588 = vmul.f32 %v528, %v586
      %v589 = vmul.f32 %v530, %v586
      %v590 = vmul.f32 %v549, %v586
      %v591 = vmul.f32 %v551, %v586
      %v592 = vmul.f32 %v555, %v586
      %v593 = vmul.f32 %v557, %v586
      %v594 = vmul.f32 %v561, %v586
      %v595 = vmul.f32 %v563, %v586
      %v596 = vsub.f32 0.0, %v528
      %v597 = vsub.f32 0.0, %v530
      %v598 = vsub.f32 0.0, %v549
      %v599 = vsub.f32 0.0, %v551
      %v600 = vsub.f32 0.0, %v555
      %v601 = vsub.f32 0.0, %v557
      %v602 = vsub.f32 0.0, %v561
      %v603 = vsub.f32 0.0, %v563
      %612 = vrot.lane.b32.xlu0 %v596, 120
      %v613 = vpop.permute.xlu0 %612
      %614 = vrot.lane.b32.xlu0 %v597, 120
      %v615 = vpop.permute.xlu0 %614
      %616 = vrot.lane.b32.xlu0 %v598, 120
      %v617 = vpop.permute.xlu0 %616
      %618 = vrot.lane.b32.xlu0 %v599, 120
      %v619 = vpop.permute.xlu0 %618
      %620 = vrot.lane.b32.xlu0 %v600, 120
      %v621 = vpop.permute.xlu0 %620
      %622 = vrot.lane.b32.xlu0 %v601, 120
      %v623 = vpop.permute.xlu0 %622
      %624 = vrot.lane.b32.xlu0 %v602, 120
      %v625 = vpop.permute.xlu0 %624
      %626 = vrot.lane.b32.xlu0 %v603, 120
      %v627 = vpop.permute.xlu0 %626
      %636 = vrot.lane.b32.xlu0 %v528, 8
      %v637 = vpop.permute.xlu0 %636
      %638 = vrot.lane.b32.xlu0 %v530, 8
      %v639 = vpop.permute.xlu0 %638
      %640 = vrot.lane.b32.xlu0 %v549, 8
      %v641 = vpop.permute.xlu0 %640
      %642 = vrot.lane.b32.xlu0 %v551, 8
      %v643 = vpop.permute.xlu0 %642
      %644 = vrot.lane.b32.xlu0 %v555, 8
      %v645 = vpop.permute.xlu0 %644
      %646 = vrot.lane.b32.xlu0 %v557, 8
      %v647 = vpop.permute.xlu0 %646
      %648 = vrot.lane.b32.xlu0 %v561, 8
      %v649 = vpop.permute.xlu0 %648
      %650 = vrot.lane.b32.xlu0 %v563, 8
      %v651 = vpop.permute.xlu0 %650
      %vm660 = vcmask 64512
      %v661 = vsel %vm660, %v613, %v637
      %v662 = vsel %vm660, %v615, %v639
      %v663 = vsel %vm660, %v617, %v641
      %v664 = vsel %vm660, %v619, %v643
      %v665 = vsel %vm660, %v621, %v645
      %v666 = vsel %vm660, %v623, %v647
      %v667 = vsel %vm660, %v625, %v649
      %v668 = vsel %vm660, %v627, %v651
      %v669 = vmul.f32 %v661, %v587
      %v670 = vmul.f32 %v662, %v587
      %v671 = vmul.f32 %v663, %v587
      %v672 = vmul.f32 %v664, %v587
      %v673 = vmul.f32 %v665, %v587
      %v674 = vmul.f32 %v666, %v587
      %v675 = vmul.f32 %v667, %v587
      %v676 = vmul.f32 %v668, %v587
      %v677 = vadd.f32 %v588, %v669
      %v678 = vadd.f32 %v589, %v670
      %v679 = vadd.f32 %v590, %v671
      %v680 = vadd.f32 %v591, %v672
      %v681 = vadd.f32 %v592, %v673
      %v682 = vadd.f32 %v593, %v674
      %v683 = vadd.f32 %v594, %v675
      %v684 = vadd.f32 %v595, %v676
      %686 = vrot.lane.b32.xlu0 %v586, 64
      %v687 = vpop.permute.xlu0 %686
      %v689 = vmul.f32 %v528, %v687
      %v690 = vmul.f32 %v530, %v687
      %v691 = vmul.f32 %v549, %v687
      %v692 = vmul.f32 %v551, %v687
      %v693 = vmul.f32 %v555, %v687
      %v694 = vmul.f32 %v557, %v687
      %v695 = vmul.f32 %v561, %v687
      %v696 = vmul.f32 %v563, %v687
      %697 = vrot.lane.b32.xlu0 %v596, 56
      %v698 = vpop.permute.xlu0 %697
      %699 = vrot.lane.b32.xlu0 %v597, 56
      %v700 = vpop.permute.xlu0 %699
      %701 = vrot.lane.b32.xlu0 %v598, 56
      %v702 = vpop.permute.xlu0 %701
      %703 = vrot.lane.b32.xlu0 %v599, 56
      %v704 = vpop.permute.xlu0 %703
      %705 = vrot.lane.b32.xlu0 %v600, 56
      %v706 = vpop.permute.xlu0 %705
      %707 = vrot.lane.b32.xlu0 %v601, 56
      %v708 = vpop.permute.xlu0 %707
      %709 = vrot.lane.b32.xlu0 %v602, 56
      %v710 = vpop.permute.xlu0 %709
      %711 = vrot.lane.b32.xlu0 %v603, 56
      %v712 = vpop.permute.xlu0 %711
      %721 = vrot.lane.b32.xlu0 %v528, 72
      %v722 = vpop.permute.xlu0 %721
      %723 = vrot.lane.b32.xlu0 %v530, 72
      %v724 = vpop.permute.xlu0 %723
      %725 = vrot.lane.b32.xlu0 %v549, 72
      %v726 = vpop.permute.xlu0 %725
      %727 = vrot.lane.b32.xlu0 %v551, 72
      %v728 = vpop.permute.xlu0 %727
      %729 = vrot.lane.b32.xlu0 %v555, 72
      %v730 = vpop.permute.xlu0 %729
      %731 = vrot.lane.b32.xlu0 %v557, 72
      %v732 = vpop.permute.xlu0 %731
      %733 = vrot.lane.b32.xlu0 %v561, 72
      %v734 = vpop.permute.xlu0 %733
      %735 = vrot.lane.b32.xlu0 %v563, 72
      %v736 = vpop.permute.xlu0 %735
      %v745 = vsel %vm660, %v698, %v722
      %v746 = vsel %vm660, %v700, %v724
      %v747 = vsel %vm660, %v702, %v726
      %v748 = vsel %vm660, %v704, %v728
      %v749 = vsel %vm660, %v706, %v730
      %v750 = vsel %vm660, %v708, %v732
      %v751 = vsel %vm660, %v710, %v734
      %v752 = vsel %vm660, %v712, %v736
      %v753 = vmul.f32 %v745, %v587
      %v754 = vmul.f32 %v746, %v587
      %v755 = vmul.f32 %v747, %v587
      %v756 = vmul.f32 %v748, %v587
      %v757 = vmul.f32 %v749, %v587
      %v758 = vmul.f32 %v750, %v587
      %v759 = vmul.f32 %v751, %v587
      %v760 = vmul.f32 %v752, %v587
      %769 = vrot.lane.b32.xlu0 %v753, 64
      %v770 = vpop.permute.xlu0 %769
      %771 = vrot.lane.b32.xlu0 %v754, 64
      %v772 = vpop.permute.xlu0 %771
      %773 = vrot.lane.b32.xlu0 %v755, 64
      %v774 = vpop.permute.xlu0 %773
      %775 = vrot.lane.b32.xlu0 %v756, 64
      %v776 = vpop.permute.xlu0 %775
      %777 = vrot.lane.b32.xlu0 %v757, 64
      %v778 = vpop.permute.xlu0 %777
      %779 = vrot.lane.b32.xlu0 %v758, 64
      %v780 = vpop.permute.xlu0 %779
      %781 = vrot.lane.b32.xlu0 %v759, 64
      %v782 = vpop.permute.xlu0 %781
      %783 = vrot.lane.b32.xlu0 %v760, 64
      %v784 = vpop.permute.xlu0 %783
      %v793 = vadd.f32 %v689, %v770
      %v794 = vadd.f32 %v690, %v772
      %v795 = vadd.f32 %v691, %v774
      %v796 = vadd.f32 %v692, %v776
      %v797 = vadd.f32 %v693, %v778
      %v798 = vadd.f32 %v694, %v780
      %v799 = vadd.f32 %v695, %v782
      %v800 = vadd.f32 %v696, %v784
      %v801 = vpack.c.bf16 %v677, %v677
      %v802 = vpack.c.bf16 %v678, %v678
      %v803 = vpack.c.bf16 %v679, %v679
      %v804 = vpack.c.bf16 %v680, %v680
      %v805 = vpack.c.bf16 %v681, %v681
      %v806 = vpack.c.bf16 %v682, %v682
      %v807 = vpack.c.bf16 %v683, %v683
      %v808 = vpack.c.bf16 %v684, %v684
      %v809 = vpack.c.bf16 %v793, %v793
      %v810 = vpack.c.bf16 %v794, %v794
      %v811 = vpack.c.bf16 %v795, %v795
      %v812 = vpack.c.bf16 %v796, %v796
      %v813 = vpack.c.bf16 %v797, %v797
      %v814 = vpack.c.bf16 %v798, %v798
      %v815 = vpack.c.bf16 %v799, %v799
      %v816 = vpack.c.bf16 %v800, %v800
      %v818 = vunpack.c.l.b16 %v809
      %v819 = vpack.c.b16 %v818, %v818
      %820 = vrot.lane.b32.xlu0 %v819, 64
      %v821 = vpop.permute.xlu0 %820
      %vm822 = vcmask 130048
      %v824 = vsel %vm822, %v801, 0
      %v827 = vsel %vm822, %v821, 0
      %829 = vmatpush.bf16.xpose.msra.mxu0 0
      %830 = vmatpush.bf16.xpose.msra.mxu0 0
      %831 = vmatpush.bf16.xpose.msra.mxu0 0
      %832 = vmatpush.bf16.xpose.msra.mxu0 0
      %833 = vmatpush.bf16.xpose.msra.mxu0 0
      %834 = vmatpush.bf16.xpose.msra.mxu0 0
      %835 = vmatpush.bf16.xpose.msra.mxu0 0
      %836 = vmatpush.bf16.xpose.msra.mxu0 %v827
      %837 = vmatmul.bf16.gmra.mxu0 %v824
      %v838 = vpop.f32.mrf.mxu0
      %v839 = vadd.f32 0.0, %v838
      %v840 = vpop.f32.mrf.mxu0
      %841 = vdwg.mxu0
      %v843 = vunpack.c.l.b16 %v810
      %v844 = vpack.c.b16 %v843, %v843
      %845 = vrot.lane.b32.xlu0 %v844, 64
      %v846 = vpop.permute.xlu0 %845
      %v848 = vsel %vm822, %v802, 0
      %v851 = vsel %vm822, %v846, 0
      %853 = vmatpush.bf16.xpose.msra.mxu0 0
      %854 = vmatpush.bf16.xpose.msra.mxu0 0
      %855 = vmatpush.bf16.xpose.msra.mxu0 0
      %856 = vmatpush.bf16.xpose.msra.mxu0 0
      %857 = vmatpush.bf16.xpose.msra.mxu0 0
      %858 = vmatpush.bf16.xpose.msra.mxu0 0
      %859 = vmatpush.bf16.xpose.msra.mxu0 0
      %860 = vmatpush.bf16.xpose.msra.mxu0 %v851
      %861 = vmatmul.bf16.gmra.mxu0 %v848
      %v862 = vpop.f32.mrf.mxu0
      %v863 = vadd.f32 0.0, %v862
      %v864 = vpop.f32.mrf.mxu0
      %865 = vdwg.mxu0
      %v867 = vunpack.c.l.b16 %v811
      %v868 = vpack.c.b16 %v867, %v867
      %869 = vrot.lane.b32.xlu0 %v868, 64
      %v870 = vpop.permute.xlu0 %869
      %v872 = vsel %vm822, %v803, 0
      %v875 = vsel %vm822, %v870, 0
      %877 = vmatpush.bf16.xpose.msra.mxu0 0
      %878 = vmatpush.bf16.xpose.msra.mxu0 0
      %879 = vmatpush.bf16.xpose.msra.mxu0 0
      %880 = vmatpush.bf16.xpose.msra.mxu0 0
      %881 = vmatpush.bf16.xpose.msra.mxu0 0
      %882 = vmatpush.bf16.xpose.msra.mxu0 0
      %883 = vmatpush.bf16.xpose.msra.mxu0 0
      %884 = vmatpush.bf16.xpose.msra.mxu0 %v875
      %885 = vmatmul.bf16.gmra.mxu0 %v872
      %v886 = vpop.f32.mrf.mxu0
      %v887 = vadd.f32 0.0, %v886
      %v888 = vpop.f32.mrf.mxu0
      %889 = vdwg.mxu0
      %v891 = vunpack.c.l.b16 %v812
      %v892 = vpack.c.b16 %v891, %v891
      %893 = vrot.lane.b32.xlu0 %v892, 64
      %v894 = vpop.permute.xlu0 %893
      %v896 = vsel %vm822, %v804, 0
      %v899 = vsel %vm822, %v894, 0
      %901 = vmatpush.bf16.xpose.msra.mxu0 0
      %902 = vmatpush.bf16.xpose.msra.mxu0 0
      %903 = vmatpush.bf16.xpose.msra.mxu0 0
      %904 = vmatpush.bf16.xpose.msra.mxu0 0
      %905 = vmatpush.bf16.xpose.msra.mxu0 0
      %906 = vmatpush.bf16.xpose.msra.mxu0 0
      %907 = vmatpush.bf16.xpose.msra.mxu0 0
      %908 = vmatpush.bf16.xpose.msra.mxu0 %v899
      %909 = vmatmul.bf16.gmra.mxu0 %v896
      %v910 = vpop.f32.mrf.mxu0
      %v911 = vadd.f32 0.0, %v910
      %v912 = vpop.f32.mrf.mxu0
      %913 = vdwg.mxu0
      %v915 = vunpack.c.l.b16 %v813
      %v916 = vpack.c.b16 %v915, %v915
      %917 = vrot.lane.b32.xlu0 %v916, 64
      %v918 = vpop.permute.xlu0 %917
      %v920 = vsel %vm822, %v805, 0
      %v923 = vsel %vm822, %v918, 0
      %925 = vmatpush.bf16.xpose.msra.mxu0 0
      %926 = vmatpush.bf16.xpose.msra.mxu0 0
      %927 = vmatpush.bf16.xpose.msra.mxu0 0
      %928 = vmatpush.bf16.xpose.msra.mxu0 0
      %929 = vmatpush.bf16.xpose.msra.mxu0 0
      %930 = vmatpush.bf16.xpose.msra.mxu0 0
      %931 = vmatpush.bf16.xpose.msra.mxu0 0
      %932 = vmatpush.bf16.xpose.msra.mxu0 %v923
      %933 = vmatmul.bf16.gmra.mxu0 %v920
      %v934 = vpop.f32.mrf.mxu0
      %v935 = vadd.f32 0.0, %v934
      %v936 = vpop.f32.mrf.mxu0
      %937 = vdwg.mxu0
      %v939 = vunpack.c.l.b16 %v814
      %v940 = vpack.c.b16 %v939, %v939
      %941 = vrot.lane.b32.xlu0 %v940, 64
      %v942 = vpop.permute.xlu0 %941
      %v944 = vsel %vm822, %v806, 0
      %v947 = vsel %vm822, %v942, 0
      %949 = vmatpush.bf16.xpose.msra.mxu0 0
      %950 = vmatpush.bf16.xpose.msra.mxu0 0
      %951 = vmatpush.bf16.xpose.msra.mxu0 0
      %952 = vmatpush.bf16.xpose.msra.mxu0 0
      %953 = vmatpush.bf16.xpose.msra.mxu0 0
      %954 = vmatpush.bf16.xpose.msra.mxu0 0
      %955 = vmatpush.bf16.xpose.msra.mxu0 0
      %956 = vmatpush.bf16.xpose.msra.mxu0 %v947
      %957 = vmatmul.bf16.gmra.mxu0 %v944
      %v958 = vpop.f32.mrf.mxu0
      %v959 = vadd.f32 0.0, %v958
      %v960 = vpop.f32.mrf.mxu0
      %961 = vdwg.mxu0
      %v963 = vunpack.c.l.b16 %v815
      %v964 = vpack.c.b16 %v963, %v963
      %965 = vrot.lane.b32.xlu0 %v964, 64
      %v966 = vpop.permute.xlu0 %965
      %v968 = vsel %vm822, %v807, 0
      %v971 = vsel %vm822, %v966, 0
      %973 = vmatpush.bf16.xpose.msra.mxu0 0
      %974 = vmatpush.bf16.xpose.msra.mxu0 0
      %975 = vmatpush.bf16.xpose.msra.mxu0 0
      %976 = vmatpush.bf16.xpose.msra.mxu0 0
      %977 = vmatpush.bf16.xpose.msra.mxu0 0
      %978 = vmatpush.bf16.xpose.msra.mxu0 0
      %979 = vmatpush.bf16.xpose.msra.mxu0 0
      %980 = vmatpush.bf16.xpose.msra.mxu0 %v971
      %981 = vmatmul.bf16.gmra.mxu0 %v968
      %v982 = vpop.f32.mrf.mxu0
      %v983 = vadd.f32 0.0, %v982
      %v984 = vpop.f32.mrf.mxu0
      %985 = vdwg.mxu0
      %v987 = vunpack.c.l.b16 %v816
      %v988 = vpack.c.b16 %v987, %v987
      %989 = vrot.lane.b32.xlu0 %v988, 64
      %v990 = vpop.permute.xlu0 %989
      %v992 = vsel %vm822, %v808, 0
      %v995 = vsel %vm822, %v990, 0
      %997 = vmatpush.bf16.xpose.msra.mxu0 0
      %998 = vmatpush.bf16.xpose.msra.mxu0 0
      %999 = vmatpush.bf16.xpose.msra.mxu0 0
      %1000 = vmatpush.bf16.xpose.msra.mxu0 0
      %1001 = vmatpush.bf16.xpose.msra.mxu0 0
      %1002 = vmatpush.bf16.xpose.msra.mxu0 0
      %1003 = vmatpush.bf16.xpose.msra.mxu0 0
      %1004 = vmatpush.bf16.xpose.msra.mxu0 %v995
      %1005 = vmatmul.bf16.gmra.mxu0 %v992
      %v1006 = vpop.f32.mrf.mxu0
      %v1007 = vadd.f32 0.0, %v1006
      %v1008 = vpop.f32.mrf.mxu0
      %1009 = vdwg.mxu0
      %v1010 = vlaneseq
      %v1011 = vshrl.u32 %v1010, 7
      %v1012 = vlaneseq
      %v1013 = vand.u32 %v1012, 127
      %vm1014 = vcmp.ge.s32.totalorder %v1011, %v1013
      %v1015 = vsel %vm1014, 1, 0
      %vm1016 = vcmp.eq.s32.totalorder %v1015, 1
      %v1017 = vsel %vm1016, %v839, -1e+30
      %v1018 = vsel %vm1016, %v863, -1e+30
      %v1019 = vsel %vm1016, %v887, -1e+30
      %v1020 = vsel %vm1016, %v911, -1e+30
      %v1021 = vsel %vm1016, %v935, -1e+30
      %v1022 = vsel %vm1016, %v959, -1e+30
      %v1023 = vsel %vm1016, %v983, -1e+30
      %v1024 = vsel %vm1016, %v1007, -1e+30
      %v1025 = vsel %vm660, %v1017, -inf
      %1026 = vmax.xlane.f32.xlu0 %v1025
      %v1027 = vpop.xlane.xlu0 %1026
      %v1028 = vsel %vm660, %v1018, -inf
      %1029 = vmax.xlane.f32.xlu0 %v1028
      %v1030 = vpop.xlane.xlu0 %1029
      %v1031 = vsel %vm660, %v1019, -inf
      %1032 = vmax.xlane.f32.xlu0 %v1031
      %v1033 = vpop.xlane.xlu0 %1032
      %v1034 = vsel %vm660, %v1020, -inf
      %1035 = vmax.xlane.f32.xlu0 %v1034
      %v1036 = vpop.xlane.xlu0 %1035
      %v1037 = vsel %vm660, %v1021, -inf
      %1038 = vmax.xlane.f32.xlu0 %v1037
      %v1039 = vpop.xlane.xlu0 %1038
      %v1040 = vsel %vm660, %v1022, -inf
      %1041 = vmax.xlane.f32.xlu0 %v1040
      %v1042 = vpop.xlane.xlu0 %1041
      %v1043 = vsel %vm660, %v1023, -inf
      %1044 = vmax.xlane.f32.xlu0 %v1043
      %v1045 = vpop.xlane.xlu0 %1044
      %v1046 = vsel %vm660, %v1024, -inf
      %1047 = vmax.xlane.f32.xlu0 %v1046
      %v1048 = vpop.xlane.xlu0 %1047
      %v1049 = vsub.f32 %v1017, %v1027
      %v1050 = vsub.f32 %v1018, %v1030
      %v1051 = vsub.f32 %v1019, %v1033
      %v1052 = vsub.f32 %v1020, %v1036
      %v1053 = vsub.f32 %v1021, %v1039
      %v1054 = vsub.f32 %v1022, %v1042
      %v1055 = vsub.f32 %v1023, %v1045
      %v1056 = vsub.f32 %v1024, %v1048
      %v1057 = vmul.f32 %v1049, 1.442695
      %v1058 = vpow.pop %v1057
      %v1059 = vmul.f32 %v1050, 1.442695
      %v1060 = vpow.pop %v1059
      %v1061 = vmul.f32 %v1051, 1.442695
      %v1062 = vpow.pop %v1061
      %v1063 = vmul.f32 %v1052, 1.442695
      %v1064 = vpow.pop %v1063
      %v1065 = vmul.f32 %v1053, 1.442695
      %v1066 = vpow.pop %v1065
      %v1067 = vmul.f32 %v1054, 1.442695
      %v1068 = vpow.pop %v1067
      %v1069 = vmul.f32 %v1055, 1.442695
      %v1070 = vpow.pop %v1069
      %v1071 = vmul.f32 %v1056, 1.442695
      %v1072 = vpow.pop %v1071
      %v1073 = vsel %vm660, %v1058, 0.0
      %1074 = vadd.xlane.f32.xlu0 %v1073
      %v1075 = vpop.xlane.xlu0 %1074
      %v1076 = vsel %vm660, %v1060, 0.0
      %1077 = vadd.xlane.f32.xlu0 %v1076
      %v1078 = vpop.xlane.xlu0 %1077
      %v1079 = vsel %vm660, %v1062, 0.0
      %1080 = vadd.xlane.f32.xlu0 %v1079
      %v1081 = vpop.xlane.xlu0 %1080
      %v1082 = vsel %vm660, %v1064, 0.0
      %1083 = vadd.xlane.f32.xlu0 %v1082
      %v1084 = vpop.xlane.xlu0 %1083
      %v1085 = vsel %vm660, %v1066, 0.0
      %1086 = vadd.xlane.f32.xlu0 %v1085
      %v1087 = vpop.xlane.xlu0 %1086
      %v1088 = vsel %vm660, %v1068, 0.0
      %1089 = vadd.xlane.f32.xlu0 %v1088
      %v1090 = vpop.xlane.xlu0 %1089
      %v1091 = vsel %vm660, %v1070, 0.0
      %1092 = vadd.xlane.f32.xlu0 %v1091
      %v1093 = vpop.xlane.xlu0 %1092
      %v1094 = vsel %vm660, %v1072, 0.0
      %1095 = vadd.xlane.f32.xlu0 %v1094
      %v1096 = vpop.xlane.xlu0 %1095
      %v1097 = vrcp.pop %v1075
      %v1098 = vrcp.pop %v1078
      %v1099 = vrcp.pop %v1081
      %v1100 = vrcp.pop %v1084
      %v1101 = vrcp.pop %v1087
      %v1102 = vrcp.pop %v1090
      %v1103 = vrcp.pop %v1093
      %v1104 = vrcp.pop %v1096
      %v1105 = vmul.f32 %v1058, %v1097
      %v1106 = vmul.f32 %v1060, %v1098
      %v1107 = vmul.f32 %v1062, %v1099
      %v1108 = vmul.f32 %v1064, %v1100
      %v1109 = vmul.f32 %v1066, %v1101
      %v1110 = vmul.f32 %v1068, %v1102
      %v1111 = vmul.f32 %v1070, %v1103
      %v1112 = vmul.f32 %v1072, %v1104
      %v1113 = vpack.c.bf16 %v1105, %v1105
      %v1114 = vpack.c.bf16 %v1106, %v1106
      %v1115 = vpack.c.bf16 %v1107, %v1107
      %v1116 = vpack.c.bf16 %v1108, %v1108
      %v1117 = vpack.c.bf16 %v1109, %v1109
      %v1118 = vpack.c.bf16 %v1110, %v1110
      %v1119 = vpack.c.bf16 %v1111, %v1111
      %v1120 = vpack.c.bf16 %v1112, %v1112
      %v1121 = vpack.c.bf16 %v542, %v542
      %v1122 = vpack.c.bf16 %v544, %v544
      %v1123 = vpack.c.bf16 %v569, %v569
      %v1124 = vpack.c.bf16 %v571, %v571
      %v1125 = vpack.c.bf16 %v575, %v575
      %v1126 = vpack.c.bf16 %v577, %v577
      %v1127 = vpack.c.bf16 %v581, %v581
      %v1128 = vpack.c.bf16 %v583, %v583
      %v1130 = vsel %vm660, %v1113, 0
      %vm1132 = vcmask 1043456
      %v1134 = vsel %vm1132, %v1121, 0
      %1136 = vmatpush.bf16.msra.mxu0 0
      %1137 = vmatpush.bf16.msra.mxu0 0
      %1138 = vmatpush.bf16.msra.mxu0 0
      %1139 = vmatpush.bf16.msra.mxu0 0
      %1140 = vmatpush.bf16.msra.mxu0 0
      %1141 = vmatpush.bf16.msra.mxu0 0
      %1142 = vmatpush.bf16.msra.mxu0 0
      %1143 = vmatpush.bf16.msra.mxu0 %v1134
      %1144 = vmatmul.bf16.gmra.mxu0 %v1130
      %v1145 = vpop.f32.mrf.mxu0
      %v1146 = vadd.f32 0.0, %v1145
      %v1147 = vpop.f32.mrf.mxu0
      %1148 = vdwg.mxu0
      %v1150 = vsel %vm660, %v1114, 0
      %v1153 = vsel %vm1132, %v1122, 0
      %1155 = vmatpush.bf16.msra.mxu0 0
      %1156 = vmatpush.bf16.msra.mxu0 0
      %1157 = vmatpush.bf16.msra.mxu0 0
      %1158 = vmatpush.bf16.msra.mxu0 0
      %1159 = vmatpush.bf16.msra.mxu0 0
      %1160 = vmatpush.bf16.msra.mxu0 0
      %1161 = vmatpush.bf16.msra.mxu0 0
      %1162 = vmatpush.bf16.msra.mxu0 %v1153
      %1163 = vmatmul.bf16.gmra.mxu0 %v1150
      %v1164 = vpop.f32.mrf.mxu0
      %v1165 = vadd.f32 0.0, %v1164
      %v1166 = vpop.f32.mrf.mxu0
      %1167 = vdwg.mxu0
      %v1169 = vsel %vm660, %v1115, 0
      %v1172 = vsel %vm1132, %v1123, 0
      %1174 = vmatpush.bf16.msra.mxu0 0
      %1175 = vmatpush.bf16.msra.mxu0 0
      %1176 = vmatpush.bf16.msra.mxu0 0
      %1177 = vmatpush.bf16.msra.mxu0 0
      %1178 = vmatpush.bf16.msra.mxu0 0
      %1179 = vmatpush.bf16.msra.mxu0 0
      %1180 = vmatpush.bf16.msra.mxu0 0
      %1181 = vmatpush.bf16.msra.mxu0 %v1172
      %1182 = vmatmul.bf16.gmra.mxu0 %v1169
      %v1183 = vpop.f32.mrf.mxu0
      %v1184 = vadd.f32 0.0, %v1183
      %v1185 = vpop.f32.mrf.mxu0
      %1186 = vdwg.mxu0
      %v1188 = vsel %vm660, %v1116, 0
      %v1191 = vsel %vm1132, %v1124, 0
      %1193 = vmatpush.bf16.msra.mxu0 0
      %1194 = vmatpush.bf16.msra.mxu0 0
      %1195 = vmatpush.bf16.msra.mxu0 0
      %1196 = vmatpush.bf16.msra.mxu0 0
      %1197 = vmatpush.bf16.msra.mxu0 0
      %1198 = vmatpush.bf16.msra.mxu0 0
      %1199 = vmatpush.bf16.msra.mxu0 0
      %1200 = vmatpush.bf16.msra.mxu0 %v1191
      %1201 = vmatmul.bf16.gmra.mxu0 %v1188
      %v1202 = vpop.f32.mrf.mxu0
      %v1203 = vadd.f32 0.0, %v1202
      %v1204 = vpop.f32.mrf.mxu0
      %1205 = vdwg.mxu0
      %v1207 = vsel %vm660, %v1117, 0
      %v1210 = vsel %vm1132, %v1125, 0
      %1212 = vmatpush.bf16.msra.mxu0 0
      %1213 = vmatpush.bf16.msra.mxu0 0
      %1214 = vmatpush.bf16.msra.mxu0 0
      %1215 = vmatpush.bf16.msra.mxu0 0
      %1216 = vmatpush.bf16.msra.mxu0 0
      %1217 = vmatpush.bf16.msra.mxu0 0
      %1218 = vmatpush.bf16.msra.mxu0 0
      %1219 = vmatpush.bf16.msra.mxu0 %v1210
      %1220 = vmatmul.bf16.gmra.mxu0 %v1207
      %v1221 = vpop.f32.mrf.mxu0
      %v1222 = vadd.f32 0.0, %v1221
      %v1223 = vpop.f32.mrf.mxu0
      %1224 = vdwg.mxu0
      %v1226 = vsel %vm660, %v1118, 0
      %v1229 = vsel %vm1132, %v1126, 0
      %1231 = vmatpush.bf16.msra.mxu0 0
      %1232 = vmatpush.bf16.msra.mxu0 0
      %1233 = vmatpush.bf16.msra.mxu0 0
      %1234 = vmatpush.bf16.msra.mxu0 0
      %1235 = vmatpush.bf16.msra.mxu0 0
      %1236 = vmatpush.bf16.msra.mxu0 0
      %1237 = vmatpush.bf16.msra.mxu0 0
      %1238 = vmatpush.bf16.msra.mxu0 %v1229
      %1239 = vmatmul.bf16.gmra.mxu0 %v1226
      %v1240 = vpop.f32.mrf.mxu0
      %v1241 = vadd.f32 0.0, %v1240
      %v1242 = vpop.f32.mrf.mxu0
      %1243 = vdwg.mxu0
      %v1245 = vsel %vm660, %v1119, 0
      %v1248 = vsel %vm1132, %v1127, 0
      %1250 = vmatpush.bf16.msra.mxu0 0
      %1251 = vmatpush.bf16.msra.mxu0 0
      %1252 = vmatpush.bf16.msra.mxu0 0
      %1253 = vmatpush.bf16.msra.mxu0 0
      %1254 = vmatpush.bf16.msra.mxu0 0
      %1255 = vmatpush.bf16.msra.mxu0 0
      %1256 = vmatpush.bf16.msra.mxu0 0
      %1257 = vmatpush.bf16.msra.mxu0 %v1248
      %1258 = vmatmul.bf16.gmra.mxu0 %v1245
      %v1259 = vpop.f32.mrf.mxu0
      %v1260 = vadd.f32 0.0, %v1259
      %v1261 = vpop.f32.mrf.mxu0
      %1262 = vdwg.mxu0
      %v1264 = vsel %vm660, %v1120, 0
      %v1267 = vsel %vm1132, %v1128, 0
      %1269 = vmatpush.bf16.msra.mxu0 0
      %1270 = vmatpush.bf16.msra.mxu0 0
      %1271 = vmatpush.bf16.msra.mxu0 0
      %1272 = vmatpush.bf16.msra.mxu0 0
      %1273 = vmatpush.bf16.msra.mxu0 0
      %1274 = vmatpush.bf16.msra.mxu0 0
      %1275 = vmatpush.bf16.msra.mxu0 0
      %1276 = vmatpush.bf16.msra.mxu0 %v1267
      %1277 = vmatmul.bf16.gmra.mxu0 %v1264
      %v1278 = vpop.f32.mrf.mxu0
      %v1279 = vadd.f32 0.0, %v1278
      %v1280 = vpop.f32.mrf.mxu0
      %1281 = vdwg.mxu0
      %v1282 = vpack.c.bf16 %v1146, %v1146
      %v1283 = vpack.c.bf16 %v1165, %v1165
      %v1284 = vpack.c.bf16 %v1184, %v1184
      %v1285 = vpack.c.bf16 %v1203, %v1203
      %v1286 = vpack.c.bf16 %v1222, %v1222
      %v1287 = vpack.c.bf16 %v1241, %v1241
      %v1288 = vpack.c.bf16 %v1260, %v1260
      %v1289 = vpack.c.bf16 %v1279, %v1279
      %v1290 = vld [vmem:[%s389] sm:$0xf]
      %v1291 = vld [vmem:[%s389 + $0x4] sm:$0xf]
      %v1292 = vld [vmem:[%s389 + $0x8] sm:$0xf]
      %v1293 = vld [vmem:[%s389 + $0xc] sm:$0xf]
      %v1294 = vld [vmem:[%s389 + $0x10] sm:$0xf]
      %v1295 = vld [vmem:[%s389 + $0x14] sm:$0xf]
      %v1296 = vld [vmem:[%s389 + $0x18] sm:$0xf]
      %v1297 = vld [vmem:[%s389 + $0x1c] sm:$0xf]
      %v1300 = vunpack.c.l.b16 %v1282
      %v1301 = vunpack.c.l.b16 %v1283
      %v1302 = vpack.c.b16 %v1301, %v1300
      %v1305 = vunpack.c.l.b16 %v1290
      %v1306 = vunpack.c.l.b16 %v1291
      %v1307 = vpack.c.b16 %v1306, %v1305
      %v1310 = vsel %vm822, %v1302, 0
      %1312 = vmatpush.bf16.msra.mxu0 0
      %1313 = vmatpush.bf16.msra.mxu0 0
      %1314 = vmatpush.bf16.msra.mxu0 0
      %1315 = vmatpush.bf16.msra.mxu0 0
      %1316 = vmatpush.bf16.msra.mxu0 0
      %1317 = vmatpush.bf16.msra.mxu0 0
      %1318 = vmatpush.bf16.msra.mxu0 0
      %1319 = vmatpush.bf16.msra.mxu0 %v1307
      %1320 = vmatmul.bf16.gmra.mxu0 %v1310
      %v1321 = vpop.f32.mrf.mxu0
      %v1322 = vadd.f32 0.0, %v1321
      %v1323 = vpop.f32.mrf.mxu0
      %v1324 = vadd.f32 0.0, %v1323
      %1325 = vdwg.mxu0
      %v1328 = vunpack.c.l.b16 %v1284
      %v1329 = vunpack.c.l.b16 %v1285
      %v1330 = vpack.c.b16 %v1329, %v1328
      %v1333 = vunpack.c.l.b16 %v1292
      %v1334 = vunpack.c.l.b16 %v1293
      %v1335 = vpack.c.b16 %v1334, %v1333
      %v1338 = vsel %vm822, %v1330, 0
      %1340 = vmatpush.bf16.msra.mxu0 0
      %1341 = vmatpush.bf16.msra.mxu0 0
      %1342 = vmatpush.bf16.msra.mxu0 0
      %1343 = vmatpush.bf16.msra.mxu0 0
      %1344 = vmatpush.bf16.msra.mxu0 0
      %1345 = vmatpush.bf16.msra.mxu0 0
      %1346 = vmatpush.bf16.msra.mxu0 0
      %1347 = vmatpush.bf16.msra.mxu0 %v1335
      %1348 = vmatmul.bf16.gmra.mxu0 %v1338
      %v1349 = vpop.f32.mrf.mxu0
      %v1350 = vadd.f32 0.0, %v1349
      %v1351 = vpop.f32.mrf.mxu0
      %v1352 = vadd.f32 0.0, %v1351
      %1353 = vdwg.mxu0
      %v1356 = vunpack.c.l.b16 %v1286
      %v1357 = vunpack.c.l.b16 %v1287
      %v1358 = vpack.c.b16 %v1357, %v1356
      %v1361 = vunpack.c.l.b16 %v1294
      %v1362 = vunpack.c.l.b16 %v1295
      %v1363 = vpack.c.b16 %v1362, %v1361
      %v1366 = vsel %vm822, %v1358, 0
      %1368 = vmatpush.bf16.msra.mxu0 0
      %1369 = vmatpush.bf16.msra.mxu0 0
      %1370 = vmatpush.bf16.msra.mxu0 0
      %1371 = vmatpush.bf16.msra.mxu0 0
      %1372 = vmatpush.bf16.msra.mxu0 0
      %1373 = vmatpush.bf16.msra.mxu0 0
      %1374 = vmatpush.bf16.msra.mxu0 0
      %1375 = vmatpush.bf16.msra.mxu0 %v1363
      %1376 = vmatmul.bf16.gmra.mxu0 %v1366
      %v1377 = vpop.f32.mrf.mxu0
      %v1378 = vadd.f32 0.0, %v1377
      %v1379 = vpop.f32.mrf.mxu0
      %v1380 = vadd.f32 0.0, %v1379
      %1381 = vdwg.mxu0
      %v1384 = vunpack.c.l.b16 %v1288
      %v1385 = vunpack.c.l.b16 %v1289
      %v1386 = vpack.c.b16 %v1385, %v1384
      %v1389 = vunpack.c.l.b16 %v1296
      %v1390 = vunpack.c.l.b16 %v1297
      %v1391 = vpack.c.b16 %v1390, %v1389
      %v1394 = vsel %vm822, %v1386, 0
      %1396 = vmatpush.bf16.msra.mxu0 0
      %1397 = vmatpush.bf16.msra.mxu0 0
      %1398 = vmatpush.bf16.msra.mxu0 0
      %1399 = vmatpush.bf16.msra.mxu0 0
      %1400 = vmatpush.bf16.msra.mxu0 0
      %1401 = vmatpush.bf16.msra.mxu0 0
      %1402 = vmatpush.bf16.msra.mxu0 0
      %1403 = vmatpush.bf16.msra.mxu0 %v1391
      %1404 = vmatmul.bf16.gmra.mxu0 %v1394
      %v1405 = vpop.f32.mrf.mxu0
      %v1406 = vadd.f32 0.0, %v1405
      %v1407 = vpop.f32.mrf.mxu0
      %v1408 = vadd.f32 0.0, %v1407
      %1409 = vdwg.mxu0
      %v1410 = vsel %vm421, %v1322, 0.0
      %v1411 = vsel %vm421, %v1350, 0.0
      %v1412 = vadd.f32 %v1410, %v1411
      %v1413 = vsel %vm421, %v1378, 0.0
      %v1414 = vadd.f32 %v1412, %v1413
      %v1415 = vsel %vm421, %v1406, 0.0
      %v1416 = vadd.f32 %v1414, %v1415
      %v1417 = vsel %vm421, %v1324, 0.0
      %v1418 = vsel %vm421, %v1352, 0.0
      %v1419 = vadd.f32 %v1417, %v1418
      %v1420 = vsel %vm421, %v1380, 0.0
      %v1421 = vadd.f32 %v1419, %v1420
      %v1422 = vsel %vm421, %v1408, 0.0
      %v1423 = vadd.f32 %v1421, %v1422
      %v1424 = vadd.f32 %v416, %v1416
      %v1425 = vadd.f32 %v417, %v1423
      %v1426 = vld [vmem:[%s395] sm:$0x1]
      %v1427 = vmul.f32 %v1424, %v1424
      %v1428 = vmul.f32 %v1425, %v1425
      %v1429 = vsel %vm421, %v1427, 0.0
      %1430 = vadd.xlane.f32.xlu0 %v1429
      %v1431 = vpop.xlane.xlu0 %1430
      %v1432 = vsel %vm421, %v1428, 0.0
      %1433 = vadd.xlane.f32.xlu0 %v1432
      %v1434 = vpop.xlane.xlu0 %1433
      %v1435 = vmul.f32 %v1431, %v434
      %v1436 = vmul.f32 %v1434, %v434
      %v1437 = vadd.f32 %v1435, 1e-05
      %v1438 = vadd.f32 %v1436, 1e-05
      %v1439 = vrsqrt.pop %v1437
      %v1440 = vmul.f32 %v1439, %v1437
      %v1441 = vmul.f32 %v1440, %v1439
      %v1442 = vmul.f32 0.5, %v1441
      %v1443 = vsub.f32 1.5, %v1442
      %v1444 = vmul.f32 %v1439, %v1443
      %vm1445 = vweird.f32 %v1437
      %vm1446 = vweird.f32 %v1439
      %vm1447 = vmor %vm1445, %vm1446
      %v1448 = vsel %vm1447, %v1439, %v1444
      %v1449 = vrsqrt.pop %v1438
      %v1450 = vmul.f32 %v1449, %v1438
      %v1451 = vmul.f32 %v1450, %v1449
      %v1452 = vmul.f32 0.5, %v1451
      %v1453 = vsub.f32 1.5, %v1452
      %v1454 = vmul.f32 %v1449, %v1453
      %vm1455 = vweird.f32 %v1438
      %vm1456 = vweird.f32 %v1449
      %vm1457 = vmor %vm1455, %vm1456
      %v1458 = vsel %vm1457, %v1449, %v1454
      %v1459 = vmul.f32 %v1424, %v1448
      %v1460 = vmul.f32 %v1425, %v1458
      %v1462 = vperm.slane %v1426, 0
      %v1464 = vmul.f32 %v1459, %v1462
      %v1465 = vmul.f32 %v1460, %v1462
      %v1466 = vpack.c.bf16 %v1465, %v1464
      %v1467 = vld [vmem:[%s400] sm:$0xff]
      %v1468 = vld [vmem:[%s400 + $0x8] sm:$0xff]
      %v1469 = vld [vmem:[%s400 + $0x10] sm:$0xff]
      %v1470 = vld [vmem:[%s400 + $0x18] sm:$0xff]
      %v1471 = vld [vmem:[%s400 + $0x20] sm:$0xff]
      %v1472 = vld [vmem:[%s400 + $0x28] sm:$0xff]
      %v1473 = vld [vmem:[%s400 + $0x30] sm:$0xff]
      %v1474 = vld [vmem:[%s400 + $0x38] sm:$0xff]
      %v1483 = vunpack.c.l.b16 %v1467
      %v1484 = vunpack.c.h.b16 %v1467
      %v1485 = vunpack.c.l.b16 %v1468
      %v1486 = vunpack.c.h.b16 %v1468
      %v1487 = vunpack.c.l.b16 %v1469
      %v1488 = vunpack.c.h.b16 %v1469
      %v1489 = vunpack.c.l.b16 %v1470
      %v1490 = vunpack.c.h.b16 %v1470
      %v1491 = vunpack.c.l.b16 %v1471
      %v1492 = vunpack.c.h.b16 %v1471
      %v1493 = vunpack.c.l.b16 %v1472
      %v1494 = vunpack.c.h.b16 %v1472
      %v1495 = vunpack.c.l.b16 %v1473
      %v1496 = vunpack.c.h.b16 %v1473
      %v1497 = vunpack.c.l.b16 %v1474
      %v1498 = vunpack.c.h.b16 %v1474
      %v1499 = vpack.c.b16 %v1485, %v1483
      %v1500 = vpack.c.b16 %v1486, %v1484
      %v1501 = vpack.c.b16 %v1489, %v1487
      %v1502 = vpack.c.b16 %v1490, %v1488
      %v1503 = vpack.c.b16 %v1493, %v1491
      %v1504 = vpack.c.b16 %v1494, %v1492
      %v1505 = vpack.c.b16 %v1497, %v1495
      %v1506 = vpack.c.b16 %v1498, %v1496
      %v1516 = vsel %vm421, %v1466, 0
      %1518 = vmatpush.bf16.msra.mxu0 0
      %1519 = vmatpush.bf16.msra.mxu0 0
      %1520 = vmatpush.bf16.msra.mxu0 0
      %1521 = vmatpush.bf16.msra.mxu0 0
      %1522 = vmatpush.bf16.msra.mxu0 %v1505
      %1523 = vmatpush.bf16.msra.mxu0 %v1503
      %1524 = vmatpush.bf16.msra.mxu0 %v1501
      %1525 = vmatpush.bf16.msra.mxu0 %v1499
      %1526 = vmatmul.bf16.gmra.mxu0 %v1516
      %v1527 = vpop.f32.mrf.mxu0
      %v1528 = vadd.f32 0.0, %v1527
      %v1529 = vpop.f32.mrf.mxu0
      %v1530 = vadd.f32 0.0, %v1529
      %1531 = vdwg.mxu0
      %1532 = vmatpush.bf16.msra.mxu0 0
      %1533 = vmatpush.bf16.msra.mxu0 0
      %1534 = vmatpush.bf16.msra.mxu0 0
      %1535 = vmatpush.bf16.msra.mxu0 0
      %1536 = vmatpush.bf16.msra.mxu0 %v1506
      %1537 = vmatpush.bf16.msra.mxu0 %v1504
      %1538 = vmatpush.bf16.msra.mxu0 %v1502
      %1539 = vmatpush.bf16.msra.mxu0 %v1500
      %1540 = vmatmul.bf16.gmra.mxu0 %v1516
      %v1541 = vpop.f32.mrf.mxu0
      %v1542 = vadd.f32 0.0, %v1541
      %v1543 = vpop.f32.mrf.mxu0
      %v1544 = vadd.f32 0.0, %v1543
      %1545 = vdwg.mxu0
      %v1546 = vmul.f32 %v1528, %v1528
      %v1547 = vmul.f32 %v1542, %v1542
      %v1548 = vmul.f32 %v1530, %v1530
      %v1549 = vmul.f32 %v1544, %v1544
      %v1550 = vmul.f32 %v1528, %v1546
      %v1551 = vmul.f32 %v1542, %v1547
      %v1552 = vmul.f32 %v1530, %v1548
      %v1553 = vmul.f32 %v1544, %v1549
      %v1554 = vmul.f32 %v1550, 0.044715
      %v1555 = vmul.f32 %v1551, 0.044715
      %v1556 = vmul.f32 %v1552, 0.044715
      %v1557 = vmul.f32 %v1553, 0.044715
      %v1558 = vadd.f32 %v1528, %v1554
      %v1559 = vadd.f32 %v1542, %v1555
      %v1560 = vadd.f32 %v1530, %v1556
      %v1561 = vadd.f32 %v1544, %v1557
      %v1562 = vmul.f32 %v1558, 0.7978846
      %v1563 = vmul.f32 %v1559, 0.7978846
      %v1564 = vmul.f32 %v1560, 0.7978846
      %v1565 = vmul.f32 %v1561, 0.7978846
      %v1566 = vtanh.pop %v1562
      %v1567 = vtanh.pop %v1563
      %v1568 = vtanh.pop %v1564
      %v1569 = vtanh.pop %v1565
      %v1570 = vadd.f32 %v1566, 1.0
      %v1571 = vadd.f32 %v1567, 1.0
      %v1572 = vadd.f32 %v1568, 1.0
      %v1573 = vadd.f32 %v1569, 1.0
      %v1574 = vmul.f32 %v1570, 0.5
      %v1575 = vmul.f32 %v1571, 0.5
      %v1576 = vmul.f32 %v1572, 0.5
      %v1577 = vmul.f32 %v1573, 0.5
      %v1578 = vmul.f32 %v1528, %v1574
      %v1579 = vmul.f32 %v1542, %v1575
      %v1580 = vmul.f32 %v1530, %v1576
      %v1581 = vmul.f32 %v1544, %v1577
      %v1582 = vpack.c.bf16 %v1580, %v1578
      %v1583 = vpack.c.bf16 %v1581, %v1579
      %v1584 = vld [vmem:[%s405] sm:$0xf]
      %v1585 = vld [vmem:[%s405 + $0x4] sm:$0xf]
      %v1586 = vld [vmem:[%s405 + $0x8] sm:$0xf]
      %v1587 = vld [vmem:[%s405 + $0xc] sm:$0xf]
      %v1588 = vld [vmem:[%s405 + $0x10] sm:$0xf]
      %v1589 = vld [vmem:[%s405 + $0x14] sm:$0xf]
      %v1590 = vld [vmem:[%s405 + $0x18] sm:$0xf]
      %v1591 = vld [vmem:[%s405 + $0x1c] sm:$0xf]
      %v1592 = vld [vmem:[%s405 + $0x20] sm:$0xf]
      %v1593 = vld [vmem:[%s405 + $0x24] sm:$0xf]
      %v1594 = vld [vmem:[%s405 + $0x28] sm:$0xf]
      %v1595 = vld [vmem:[%s405 + $0x2c] sm:$0xf]
      %v1596 = vld [vmem:[%s405 + $0x30] sm:$0xf]
      %v1597 = vld [vmem:[%s405 + $0x34] sm:$0xf]
      %v1598 = vld [vmem:[%s405 + $0x38] sm:$0xf]
      %v1599 = vld [vmem:[%s405 + $0x3c] sm:$0xf]
      %v1600 = vld [vmem:[%s405 + $0x40] sm:$0xf]
      %v1601 = vld [vmem:[%s405 + $0x44] sm:$0xf]
      %v1602 = vld [vmem:[%s405 + $0x48] sm:$0xf]
      %v1603 = vld [vmem:[%s405 + $0x4c] sm:$0xf]
      %v1604 = vld [vmem:[%s405 + $0x50] sm:$0xf]
      %v1605 = vld [vmem:[%s405 + $0x54] sm:$0xf]
      %v1606 = vld [vmem:[%s405 + $0x58] sm:$0xf]
      %v1607 = vld [vmem:[%s405 + $0x5c] sm:$0xf]
      %v1608 = vld [vmem:[%s405 + $0x60] sm:$0xf]
      %v1609 = vld [vmem:[%s405 + $0x64] sm:$0xf]
      %v1610 = vld [vmem:[%s405 + $0x68] sm:$0xf]
      %v1611 = vld [vmem:[%s405 + $0x6c] sm:$0xf]
      %v1612 = vld [vmem:[%s405 + $0x70] sm:$0xf]
      %v1613 = vld [vmem:[%s405 + $0x74] sm:$0xf]
      %v1614 = vld [vmem:[%s405 + $0x78] sm:$0xf]
      %v1615 = vld [vmem:[%s405 + $0x7c] sm:$0xf]
      %v1648 = vunpack.c.l.b16 %v1584
      %v1649 = vunpack.c.l.b16 %v1585
      %v1650 = vunpack.c.l.b16 %v1586
      %v1651 = vunpack.c.l.b16 %v1587
      %v1652 = vunpack.c.l.b16 %v1588
      %v1653 = vunpack.c.l.b16 %v1589
      %v1654 = vunpack.c.l.b16 %v1590
      %v1655 = vunpack.c.l.b16 %v1591
      %v1656 = vunpack.c.l.b16 %v1592
      %v1657 = vunpack.c.l.b16 %v1593
      %v1658 = vunpack.c.l.b16 %v1594
      %v1659 = vunpack.c.l.b16 %v1595
      %v1660 = vunpack.c.l.b16 %v1596
      %v1661 = vunpack.c.l.b16 %v1597
      %v1662 = vunpack.c.l.b16 %v1598
      %v1663 = vunpack.c.l.b16 %v1599
      %v1664 = vunpack.c.l.b16 %v1600
      %v1665 = vunpack.c.l.b16 %v1601
      %v1666 = vunpack.c.l.b16 %v1602
      %v1667 = vunpack.c.l.b16 %v1603
      %v1668 = vunpack.c.l.b16 %v1604
      %v1669 = vunpack.c.l.b16 %v1605
      %v1670 = vunpack.c.l.b16 %v1606
      %v1671 = vunpack.c.l.b16 %v1607
      %v1672 = vunpack.c.l.b16 %v1608
      %v1673 = vunpack.c.l.b16 %v1609
      %v1674 = vunpack.c.l.b16 %v1610
      %v1675 = vunpack.c.l.b16 %v1611
      %v1676 = vunpack.c.l.b16 %v1612
      %v1677 = vunpack.c.l.b16 %v1613
      %v1678 = vunpack.c.l.b16 %v1614
      %v1679 = vunpack.c.l.b16 %v1615
      %v1680 = vpack.c.b16 %v1649, %v1648
      %v1681 = vpack.c.b16 %v1651, %v1650
      %v1682 = vpack.c.b16 %v1653, %v1652
      %v1683 = vpack.c.b16 %v1655, %v1654
      %v1684 = vpack.c.b16 %v1657, %v1656
      %v1685 = vpack.c.b16 %v1659, %v1658
      %v1686 = vpack.c.b16 %v1661, %v1660
      %v1687 = vpack.c.b16 %v1663, %v1662
      %v1688 = vpack.c.b16 %v1665, %v1664
      %v1689 = vpack.c.b16 %v1667, %v1666
      %v1690 = vpack.c.b16 %v1669, %v1668
      %v1691 = vpack.c.b16 %v1671, %v1670
      %v1692 = vpack.c.b16 %v1673, %v1672
      %v1693 = vpack.c.b16 %v1675, %v1674
      %v1694 = vpack.c.b16 %v1677, %v1676
      %v1695 = vpack.c.b16 %v1679, %v1678
      %1712 = vmatpush.bf16.msra.mxu0 %v1687
      %1713 = vmatpush.bf16.msra.mxu0 %v1686
      %1714 = vmatpush.bf16.msra.mxu0 %v1685
      %1715 = vmatpush.bf16.msra.mxu0 %v1684
      %1716 = vmatpush.bf16.msra.mxu0 %v1683
      %1717 = vmatpush.bf16.msra.mxu0 %v1682
      %1718 = vmatpush.bf16.msra.mxu0 %v1681
      %1719 = vmatpush.bf16.msra.mxu0 %v1680
      %1720 = vmatmul.bf16.gmra.mxu0 %v1582
      %v1721 = vpop.f32.mrf.mxu0
      %v1722 = vadd.f32 0.0, %v1721
      %v1723 = vpop.f32.mrf.mxu0
      %v1724 = vadd.f32 0.0, %v1723
      %1725 = vdwg.mxu0
      %1726 = vmatpush.bf16.msra.mxu0 %v1695
      %1727 = vmatpush.bf16.msra.mxu0 %v1694
      %1728 = vmatpush.bf16.msra.mxu0 %v1693
      %1729 = vmatpush.bf16.msra.mxu0 %v1692
      %1730 = vmatpush.bf16.msra.mxu0 %v1691
      %1731 = vmatpush.bf16.msra.mxu0 %v1690
      %1732 = vmatpush.bf16.msra.mxu0 %v1689
      %1733 = vmatpush.bf16.msra.mxu0 %v1688
      %1734 = vmatmul.bf16.gmra.mxu0 %v1583
      %v1735 = vpop.f32.mrf.mxu0
      %v1736 = vadd.f32 %v1722, %v1735
      %v1737 = vpop.f32.mrf.mxu0
      %v1738 = vadd.f32 %v1724, %v1737
      %1739 = vdwg.mxu0
      %v1740 = vadd.f32 %v1424, %v1736
      %v1741 = vadd.f32 %v1425, %v1738
      %1742 = vst.msk [vmem:[%s9] sm:$0xff] %vm421, %v1740
      %1743 = vst.msk [vmem:[%s9 + $0x8] sm:$0xff] %vm421, %v1741
      // Predicated region
      $region61: #{autoregressive_model.2} parent=55 // pred_check
        %p1744 = pneg %p252
      $region62: #{autoregressive_model.2} parent=55 // pred_check_branch
        %1746 = sbr.rel (%p1744) target = $region64
      $region63: #{autoregressive_model.2} parent=55 // pred_region
        _
      $region64: #{autoregressive_model.2} parent=55 // pred_fallthru
        _
      // Predicated region
      $region65: #{autoregressive_model.2} parent=55 // pred_check
        %p1747 = pneg %p252
      $region66: #{autoregressive_model.2} parent=55 // pred_check_branch
        %1749 = sbr.rel (%p1747) target = $region68
      $region67: #{autoregressive_model.2} parent=55 // pred_region
        _
      $region68: #{autoregressive_model.2} parent=55 // pred_fallthru
        _
    $region56: #{autoregressive_model.2} parent=5 // pred_fallthru
      _
    %p1750 = scmp.le.s32.totalorder 2, %s15
    // Predicated region
    $region69: #{autoregressive_model.2} parent=5 // pred_check
      %p1751 = pneg %p1750
    $region70: #{autoregressive_model.2} parent=5 // pred_check_branch
      %1753 = sbr.rel (%p1751) target = $region72
    $region71: #{autoregressive_model.2} parent=5 // pred_region
      %s1754 = ssub.s32 %s15, 2
    $region72: #{autoregressive_model.2} parent=5 // pred_fallthru
      _
  $region6: #{autoregressive_model.2} parent=0 // loop_footer
    %s19 = sadd.s32 1, %s15
  $region7: #{autoregressive_model.2} parent=0 // loop_footer_branch
    %14 = sbr.rel target = $region3
  $region8: #{autoregressive_model.2} parent=0 // loop_exit
    _

</llo_original>
